<compile_context>
chip_gen: v5e
topology: v5e:2x2
jax: 0.10.0
libtpu: 0.0.40
codegen_flags: <defaults>
</compile_context>

<pallas_src>
import jax
import jax.numpy as jnp
import numpy as np
from jax import lax
from jax.experimental import pallas as pl
from jax.experimental.pallas import tpu as pltpu


def bottleneck_kernel(x_top_ref, x_ref, x_bot_ref,
                      s1_ref, b1_ref, w1_ref,
                      s2_ref, b2_ref, w2_ref,
                      s3_ref, b3_ref, w3_ref,
                      o_ref, t2p_ref, acc_ref):
    _, TH, W, Cin = x_ref.shape
    P = w1_ref.shape[1]          # planes
    Cout = w3_ref.shape[1]       # planes * expansion (== Cin)
    R = TH + 2                   # tile rows + 1-row halo above and below

    i = pl.program_id(1)
    n_h = pl.num_programs(1)

    # ---- stem: BN1 -> ReLU -> conv1(1x1) -> BN2 -> ReLU over tile + halo rows ----
    x_ext = jnp.concatenate([x_top_ref[...].reshape(1, W, Cin),
                             x_ref[...].reshape(TH, W, Cin),
                             x_bot_ref[...].reshape(1, W, Cin)], axis=0)   # (R, W, Cin) f32
    a = x_ext.reshape(R * W, Cin)
    a = jnp.maximum(a * s1_ref[...] + b1_ref[...], 0.0)                    # f32 elementwise
    a = jnp.dot(a.astype(jnp.bfloat16), w1_ref[...],
                preferred_element_type=jnp.float32)                        # (R*W, P) f32 acc
    a = jnp.maximum(a * s2_ref[...] + b2_ref[...], 0.0)
    t2 = a.reshape(R, W, P)

    # conv2 zero-padding in H: halo rows outside the image must be zero.
    row = lax.broadcasted_iota(jnp.int32, (R, 1, 1), 0)
    kill = ((i == 0) & (row == 0)) | ((i == n_h - 1) & (row == R - 1))
    t2 = jnp.where(kill, 0.0, t2)

    # ---- bf16 W-padded conv2 input tile; only the 1-pixel W border is zeroed ----
    t2p_ref[:, 0:1, :] = jnp.zeros((R, 1, P), t2p_ref.dtype)
    t2p_ref[:, W + 1:W + 2, :] = jnp.zeros((R, 1, P), t2p_ref.dtype)
    t2p_ref[:, 1:W + 1, :] = t2.astype(t2p_ref.dtype)

    # ---- conv2: 3 matmuls (one per ky) with kx folded into K = 3*P ----
    for dy in range(3):
        rows = t2p_ref[dy:dy + TH, :, :]                                   # (TH, W+2, P)
        op = jnp.concatenate([rows[:, 0:W, :],
                              rows[:, 1:W + 1, :],
                              rows[:, 2:W + 2, :]], axis=-1)               # (TH, W, 3P) bf16
        contrib = jnp.dot(op.reshape(TH * W, 3 * P), w2_ref[dy],
                          preferred_element_type=jnp.float32)              # (TH*W, P) f32
        if dy == 0:
            acc_ref[...] = contrib
        else:
            acc_ref[...] += contrib

    # ---- BN3 -> ReLU -> conv3(1x1) -> residual add ----
    t3 = jnp.maximum(acc_ref[...] * s3_ref[...] + b3_ref[...], 0.0)
    t4 = jnp.dot(t3.astype(jnp.bfloat16), w3_ref[...],
                 preferred_element_type=jnp.float32)                       # (TH*W, Cout)
    o_ref[...] = (t4.reshape(1, TH, W, Cout) + x_ref[...]).astype(o_ref.dtype)


def fold_bn(gamma, beta, mean, var, eps=1e-5):
    scale = gamma / jnp.sqrt(var + eps)
    shift = beta - mean * scale
    return scale.astype(jnp.float32), shift.astype(jnp.float32)


def init_params(key, inplanes, planes):
    expansion = 4
    ks = jax.random.split(key, 15)
    p = {}
    # BN params (eval mode: gamma/beta + running stats) folded into scale/shift.
    for i, c in zip((1, 2, 3), (inplanes, planes, planes)):
        g = 1.0 + 0.1 * jax.random.normal(ks[4 * (i - 1) + 0], (c,), jnp.float32)
        b = 0.1 * jax.random.normal(ks[4 * (i - 1) + 1], (c,), jnp.float32)
        m = 0.1 * jax.random.normal(ks[4 * (i - 1) + 2], (c,), jnp.float32)
        v = 0.5 + jax.random.uniform(ks[4 * (i - 1) + 3], (c,), jnp.float32)
        p[f"s{i}"], p[f"b{i}"] = fold_bn(g, b, m, v)
    # Conv weights stored bf16 in matmul / HWIO layouts (MXU consumes bf16, accumulates f32).
    p["w1"] = (0.1 * jax.random.normal(ks[12], (inplanes, planes), jnp.float32)
               ).astype(jnp.bfloat16)
    p["w2"] = (0.1 * jax.random.normal(ks[13], (3, 3, planes, planes), jnp.float32)
               ).astype(jnp.bfloat16)
    p["w3"] = (0.1 * jax.random.normal(ks[14], (planes, planes * expansion), jnp.float32)
               ).astype(jnp.bfloat16)
    return p


def bottleneck_forward(x_nhwc, params, *, tile_h=8):
    """x_nhwc: (N, H, W, Cin) float32, NHWC end-to-end. Returns (N, H, W, Cin) float32."""
    N, H, W, Cin = x_nhwc.shape
    P = params["w1"].shape[1]
    Cout = params["w3"].shape[1]
    assert Cout == Cin, "residual add requires inplanes == planes * expansion"

    TH = min(tile_h, H)                      # 8-row strips: fits v7x 64 MiB VMEM budget
    assert H % TH == 0, "H must be a multiple of the row-tile size"
    n_h = H // TH

    x = x_nhwc.astype(jnp.float32)
    args = (
        x, x, x,                                               # halo-top / main / halo-bottom views
        params["s1"].reshape(1, Cin), params["b1"].reshape(1, Cin),
        params["w1"],                                          # (Cin, P)        bf16
        params["s2"].reshape(1, P), params["b2"].reshape(1, P),
        params["w2"].reshape(3, 3 * P, P),                     # (ky, kx*P, P)   bf16
        params["s3"].reshape(1, P), params["b3"].reshape(1, P),
        params["w3"],                                          # (P, Cout)       bf16
    )

    top_map = lambda n, i: (n, jnp.maximum(i * TH - 1, 0), 0, 0)     # row above tile (clamped)
    mid_map = lambda n, i: (n, i, 0, 0)
    bot_map = lambda n, i: (n, jnp.minimum((i + 1) * TH, H - 1), 0, 0)  # row below tile (clamped)
    c2 = lambda n, i: (0, 0)                                   # weights/scales: DMA'd once
    c3 = lambda n, i: (0, 0, 0)

    in_specs = [
        pl.BlockSpec((1, 1, W, Cin), top_map),                 # halo row above
        pl.BlockSpec((1, TH, W, Cin), mid_map),                # main tile (also residual)
        pl.BlockSpec((1, 1, W, Cin), bot_map),                 # halo row below
        pl.BlockSpec((1, Cin), c2), pl.BlockSpec((1, Cin), c2),
        pl.BlockSpec((Cin, P), c2),
        pl.BlockSpec((1, P), c2), pl.BlockSpec((1, P), c2),
        pl.BlockSpec((3, 3 * P, P), c3),
        pl.BlockSpec((1, P), c2), pl.BlockSpec((1, P), c2),
        pl.BlockSpec((P, Cout), c2),
    ]

    grid_spec = pltpu.PrefetchScalarGridSpec(
        num_scalar_prefetch=0,
        grid=(N, n_h),
        in_specs=in_specs,
        out_specs=pl.BlockSpec((1, TH, W, Cout), mid_map),
        scratch_shapes=[
            pltpu.VMEM((TH + 2, W + 2, P), jnp.bfloat16),      # W-padded conv2 input tile
            pltpu.VMEM((TH * W, P), jnp.float32),              # conv2 accumulator
        ],
    )

    return pl.pallas_call(
        bottleneck_kernel,
        out_shape=jax.ShapeDtypeStruct((N, H, W, Cout), jnp.float32),
        grid_spec=grid_spec,
        compiler_params=pltpu.CompilerParams(
            # Both grid axes are independent -> megacore / v7x dual-TC can split them.
            dimension_semantics=("parallel", "parallel"),
            # Sized with headroom under v7x's 64 MiB/TC physical VMEM.
            vmem_limit_bytes=48 * 1024 * 1024,
        ),
    )(*args)


def bottleneck_reference(x_nhwc, params):
    """Pure-JAX NHWC reference (same eval-mode folded-BN semantics) for verification."""
    x = x_nhwc.astype(jnp.float32)
    dn = ("NHWC", "HWIO", "NHWC")
    hi = lax.Precision.HIGHEST
    w1 = params["w1"].astype(jnp.float32)[None, None]
    w2 = params["w2"].astype(jnp.float32)
    w3 = params["w3"].astype(jnp.float32)[None, None]
    t = jnp.maximum(x * params["s1"] + params["b1"], 0.0)
    t = lax.conv_general_dilated(t, w1, (1, 1), "VALID", dimension_numbers=dn, precision=hi)
    t = jnp.maximum(t * params["s2"] + params["b2"], 0.0)
    t = lax.conv_general_dilated(t, w2, (1, 1), ((1, 1), (1, 1)), dimension_numbers=dn,
                                 precision=hi)
    t = jnp.maximum(t * params["s3"] + params["b3"], 0.0)
    t = lax.conv_general_dilated(t, w3, (1, 1), "VALID", dimension_numbers=dn, precision=hi)
    return t + x


if __name__ == "__main__":
    # inplanes=128, planes=32 (expansion 4 -> Cout=128): lane-dense channel dims,
    # small batch/spatial extent so the script stays tiny and fast.
    inplanes, planes = 128, 32
    N, H, W = 2, 16, 16

    key = jax.random.PRNGKey(0)
    kx, kp = jax.random.split(key)
    x = jax.random.normal(kx, (N, H, W, inplanes), jnp.float32)   # NHWC end-to-end
    params = init_params(kp, inplanes, planes)

    out = jax.block_until_ready(bottleneck_forward(x, params))
    ref = jax.block_until_ready(bottleneck_reference(x, params))

    assert out.shape == (N, H, W, planes * 4)
    # bf16 matmul inputs (f32 accumulation) vs f32 reference -> bf16-appropriate tolerance.
    np.testing.assert_allclose(np.asarray(out), np.asarray(ref), rtol=5e-2, atol=5e-2)
    print("KERNEL_OK")
</pallas_src>

<mosaic_0001>
module attributes {stable_mosaic.version = 11 : i64} {
  func.func @bottleneck_kernel(%arg0: i32, %arg1: i32, %arg2: memref<1x1x16x128xf32, #tpu.memory_space<vmem>>, %arg3: memref<1x8x16x128xf32, #tpu.memory_space<vmem>>, %arg4: memref<1x1x16x128xf32, #tpu.memory_space<vmem>>, %arg5: memref<1x128xf32, #tpu.memory_space<vmem>>, %arg6: memref<1x128xf32, #tpu.memory_space<vmem>>, %arg7: memref<128x32xbf16, #tpu.memory_space<vmem>>, %arg8: memref<1x32xf32, #tpu.memory_space<vmem>>, %arg9: memref<1x32xf32, #tpu.memory_space<vmem>>, %arg10: memref<3x96x32xbf16, #tpu.memory_space<vmem>>, %arg11: memref<1x32xf32, #tpu.memory_space<vmem>>, %arg12: memref<1x32xf32, #tpu.memory_space<vmem>>, %arg13: memref<32x128xbf16, #tpu.memory_space<vmem>>, %arg14: memref<1x8x16x128xf32, #tpu.memory_space<vmem>>, %arg15: memref<10x18x32xbf16, #tpu.memory_space<vmem>>, %arg16: memref<128x32xf32, #tpu.memory_space<vmem>>) attributes {dimension_semantics = [#tpu.dimension_semantics<parallel>, #tpu.dimension_semantics<parallel>], iteration_bounds = array<i64: 2, 2>, scalar_prefetch = 0 : i64, scratch_operands = 2 : i64, tpu.core_type = #tpu.core_type<tc>, window_params = [{transform_indices = @transform_0, window_bounds = array<i64: 1, 1, 16, 128>}, {transform_indices = @transform_1, window_bounds = array<i64: 1, 8, 16, 128>}, {transform_indices = @transform_2, window_bounds = array<i64: 1, 1, 16, 128>}, {pipeline_mode = #tpu.pipeline_mode<synchronous>, transform_indices = @transform_3, window_bounds = array<i64: 1, 128>}, {pipeline_mode = #tpu.pipeline_mode<synchronous>, transform_indices = @transform_4, window_bounds = array<i64: 1, 128>}, {pipeline_mode = #tpu.pipeline_mode<synchronous>, transform_indices = @transform_5, window_bounds = array<i64: 128, 32>}, {pipeline_mode = #tpu.pipeline_mode<synchronous>, transform_indices = @transform_6, window_bounds = array<i64: 1, 32>}, {pipeline_mode = #tpu.pipeline_mode<synchronous>, transform_indices = @transform_7, window_bounds = array<i64: 1, 32>}, {pipeline_mode = #tpu.pipeline_mode<synchronous>, transform_indices = @transform_8, window_bounds = array<i64: 3, 96, 32>}, {pipeline_mode = #tpu.pipeline_mode<synchronous>, transform_indices = @transform_9, window_bounds = array<i64: 1, 32>}, {pipeline_mode = #tpu.pipeline_mode<synchronous>, transform_indices = @transform_10, window_bounds = array<i64: 1, 32>}, {pipeline_mode = #tpu.pipeline_mode<synchronous>, transform_indices = @transform_11, window_bounds = array<i64: 32, 128>}, {transform_indices = @transform_12, window_bounds = array<i64: 1, 8, 16, 128>}]} {
    %c0 = arith.constant 0 : index
    %c0_0 = arith.constant 0 : index
    %c0_1 = arith.constant 0 : index
    %c0_2 = arith.constant 0 : index
    %0 = vector.load %arg2[%c0, %c0_0, %c0_1, %c0_2] : memref<1x1x16x128xf32, #tpu.memory_space<vmem>>, vector<1x1x16x128xf32>
    %1 = vector.shape_cast %0 : vector<1x1x16x128xf32> to vector<1x16x128xf32>
    %c0_3 = arith.constant 0 : index
    %c0_4 = arith.constant 0 : index
    %c0_5 = arith.constant 0 : index
    %c0_6 = arith.constant 0 : index
    %2 = vector.load %arg3[%c0_3, %c0_4, %c0_5, %c0_6] : memref<1x8x16x128xf32, #tpu.memory_space<vmem>>, vector<1x8x16x128xf32>
    %3 = vector.shape_cast %2 : vector<1x8x16x128xf32> to vector<8x16x128xf32>
    %c0_7 = arith.constant 0 : index
    %c0_8 = arith.constant 0 : index
    %c0_9 = arith.constant 0 : index
    %c0_10 = arith.constant 0 : index
    %4 = vector.load %arg4[%c0_7, %c0_8, %c0_9, %c0_10] : memref<1x1x16x128xf32, #tpu.memory_space<vmem>>, vector<1x1x16x128xf32>
    %5 = vector.shape_cast %4 : vector<1x1x16x128xf32> to vector<1x16x128xf32>
    %6 = tpu.concatenate %1, %3, %5 in 0 : vector<1x16x128xf32>, vector<8x16x128xf32>, vector<1x16x128xf32> -> vector<10x16x128xf32>
    %7 = vector.shape_cast %6 : vector<10x16x128xf32> to vector<160x128xf32>
    %c0_11 = arith.constant 0 : index
    %c0_12 = arith.constant 0 : index
    %8 = vector.load %arg5[%c0_11, %c0_12] : memref<1x128xf32, #tpu.memory_space<vmem>>, vector<1x128xf32>
    %9 = vector.broadcast %8 : vector<1x128xf32> to vector<160x128xf32>
    %10 = arith.mulf %7, %9 : vector<160x128xf32>
    %c0_13 = arith.constant 0 : index
    %c0_14 = arith.constant 0 : index
    %11 = vector.load %arg6[%c0_13, %c0_14] : memref<1x128xf32, #tpu.memory_space<vmem>>, vector<1x128xf32>
    %12 = vector.broadcast %11 : vector<1x128xf32> to vector<160x128xf32>
    %13 = arith.addf %10, %12 : vector<160x128xf32>
    %cst = arith.constant 0.000000e+00 : f32
    %14 = vector.broadcast %cst : f32 to vector<160x128xf32>
    %15 = arith.maximumf %13, %14 : vector<160x128xf32>
    %16 = arith.truncf %15 : vector<160x128xf32> to vector<160x128xbf16>
    %c0_15 = arith.constant 0 : index
    %c0_16 = arith.constant 0 : index
    %17 = vector.load %arg7[%c0_15, %c0_16] : memref<128x32xbf16, #tpu.memory_space<vmem>>, vector<128x32xbf16>
    %cst_17 = arith.constant dense<0.000000e+00> : vector<160x32xf32>
    %18 = tpu.matmul %16, %17, %cst_17 {dimension_numbers = #tpu.dot_dimension_numbers<[1], [0], [0], [1], [0, 0, 1, 1], [], []>} : vector<160x128xbf16>, vector<128x32xbf16>, vector<160x32xf32> -> vector<160x32xf32>
    %c0_18 = arith.constant 0 : index
    %c0_19 = arith.constant 0 : index
    %19 = vector.load %arg8[%c0_18, %c0_19] : memref<1x32xf32, #tpu.memory_space<vmem>>, vector<1x32xf32>
    %20 = vector.broadcast %19 : vector<1x32xf32> to vector<160x32xf32>
    %21 = arith.mulf %18, %20 : vector<160x32xf32>
    %c0_20 = arith.constant 0 : index
    %c0_21 = arith.constant 0 : index
    %22 = vector.load %arg9[%c0_20, %c0_21] : memref<1x32xf32, #tpu.memory_space<vmem>>, vector<1x32xf32>
    %23 = vector.broadcast %22 : vector<1x32xf32> to vector<160x32xf32>
    %24 = arith.addf %21, %23 : vector<160x32xf32>
    %cst_22 = arith.constant 0.000000e+00 : f32
    %25 = vector.broadcast %cst_22 : f32 to vector<160x32xf32>
    %26 = arith.maximumf %24, %25 : vector<160x32xf32>
    %27 = vector.shape_cast %26 : vector<160x32xf32> to vector<10x16x32xf32>
    %28 = tpu.iota {dimensions = array<i32: 0>} : vector<10x1x1xi32>
    %c0_i32 = arith.constant 0 : i32
    %29 = arith.cmpi eq, %arg1, %c0_i32 : i32
    %c0_i32_23 = arith.constant 0 : i32
    %30 = vector.broadcast %c0_i32_23 : i32 to vector<10x1x1xi32>
    %31 = arith.cmpi eq, %28, %30 : vector<10x1x1xi32>
    %32 = vector.broadcast %29 : i1 to vector<10x1x1xi1>
    %33 = arith.andi %32, %31 : vector<10x1x1xi1>
    %c1_i32 = arith.constant 1 : i32
    %34 = arith.cmpi eq, %arg1, %c1_i32 : i32
    %c9_i32 = arith.constant 9 : i32
    %35 = vector.broadcast %c9_i32 : i32 to vector<10x1x1xi32>
    %36 = arith.cmpi eq, %28, %35 : vector<10x1x1xi32>
    %37 = vector.broadcast %34 : i1 to vector<10x1x1xi1>
    %38 = arith.andi %37, %36 : vector<10x1x1xi1>
    %39 = arith.ori %33, %38 : vector<10x1x1xi1>
    %cst_24 = arith.constant 0.000000e+00 : f32
    %40 = vector.shape_cast %39 : vector<10x1x1xi1> to vector<10x1x1xi1>
    %41 = vector.broadcast %40 : vector<10x1x1xi1> to vector<10x16x32xi1>
    %42 = vector.broadcast %cst_24 : f32 to vector<10x16x32xf32>
    %43 = arith.select %41, %42, %27 : vector<10x16x32xi1>, vector<10x16x32xf32>
    %cst_25 = arith.constant 0.000000e+00 : bf16
    %44 = vector.broadcast %cst_25 : bf16 to vector<10x1x32xbf16>
    %c0_26 = arith.constant 0 : index
    %c0_27 = arith.constant 0 : index
    %c0_28 = arith.constant 0 : index
    %45 = vector.load %arg15[%c0_26, %c0_27, %c0_28] : memref<10x18x32xbf16, #tpu.memory_space<vmem>>, vector<10x1x32xbf16>
    tpu.vector_store %arg15[%c0_26, %c0_27, %c0_28], %44 {strides = array<i32>} : memref<10x18x32xbf16, #tpu.memory_space<vmem>>, vector<10x1x32xbf16>,
    %cst_29 = arith.constant 0.000000e+00 : bf16
    %46 = vector.broadcast %cst_29 : bf16 to vector<10x1x32xbf16>
    %c0_30 = arith.constant 0 : index
    %c17 = arith.constant 17 : index
    %c0_31 = arith.constant 0 : index
    %47 = vector.load %arg15[%c0_30, %c17, %c0_31] : memref<10x18x32xbf16, #tpu.memory_space<vmem>>, vector<10x1x32xbf16>
    tpu.vector_store %arg15[%c0_30, %c17, %c0_31], %46 {strides = array<i32>} : memref<10x18x32xbf16, #tpu.memory_space<vmem>>, vector<10x1x32xbf16>,
    %48 = arith.truncf %43 : vector<10x16x32xf32> to vector<10x16x32xbf16>
    %c0_32 = arith.constant 0 : index
    %c1 = arith.constant 1 : index
    %c0_33 = arith.constant 0 : index
    %49 = vector.load %arg15[%c0_32, %c1, %c0_33] : memref<10x18x32xbf16, #tpu.memory_space<vmem>>, vector<10x16x32xbf16>
    tpu.vector_store %arg15[%c0_32, %c1, %c0_33], %48 {strides = array<i32>} : memref<10x18x32xbf16, #tpu.memory_space<vmem>>, vector<10x16x32xbf16>,
    %c0_34 = arith.constant 0 : index
    %c0_35 = arith.constant 0 : index
    %c0_36 = arith.constant 0 : index
    %50 = vector.load %arg15[%c0_34, %c0_35, %c0_36] : memref<10x18x32xbf16, #tpu.memory_space<vmem>>, vector<8x18x32xbf16>
    %51 = vector.extract_strided_slice %50 {offsets = [0, 0, 0], sizes = [8, 16, 32], strides = [1, 1, 1]} : vector<8x18x32xbf16> to vector<8x16x32xbf16>
    %52 = vector.extract_strided_slice %50 {offsets = [0, 1, 0], sizes = [8, 16, 32], strides = [1, 1, 1]} : vector<8x18x32xbf16> to vector<8x16x32xbf16>
    %53 = vector.extract_strided_slice %50 {offsets = [0, 2, 0], sizes = [8, 16, 32], strides = [1, 1, 1]} : vector<8x18x32xbf16> to vector<8x16x32xbf16>
    %54 = tpu.concatenate %51, %52, %53 in 2 : vector<8x16x32xbf16>, vector<8x16x32xbf16>, vector<8x16x32xbf16> -> vector<8x16x96xbf16>
    %55 = vector.shape_cast %54 : vector<8x16x96xbf16> to vector<128x96xbf16>
    %c0_37 = arith.constant 0 : index
    %c0_38 = arith.constant 0 : index
    %c0_39 = arith.constant 0 : index
    %56 = vector.load %arg10[%c0_37, %c0_38, %c0_39] : memref<3x96x32xbf16, #tpu.memory_space<vmem>>, vector<1x96x32xbf16>
    %57 = vector.shape_cast %56 : vector<1x96x32xbf16> to vector<96x32xbf16>
    %cst_40 = arith.constant dense<0.000000e+00> : vector<128x32xf32>
    %58 = tpu.matmul %55, %57, %cst_40 {dimension_numbers = #tpu.dot_dimension_numbers<[1], [0], [0], [1], [0, 0, 1, 1], [], []>} : vector<128x96xbf16>, vector<96x32xbf16>, vector<128x32xf32> -> vector<128x32xf32>
    %c0_41 = arith.constant 0 : index
    %c0_42 = arith.constant 0 : index
    %59 = vector.load %arg16[%c0_41, %c0_42] : memref<128x32xf32, #tpu.memory_space<vmem>>, vector<128x32xf32>
    tpu.vector_store %arg16[%c0_41, %c0_42], %58 {strides = array<i32>} : memref<128x32xf32, #tpu.memory_space<vmem>>, vector<128x32xf32>,
    %c1_43 = arith.constant 1 : index
    %c0_44 = arith.constant 0 : index
    %c0_45 = arith.constant 0 : index
    %60 = vector.load %arg15[%c1_43, %c0_44, %c0_45] : memref<10x18x32xbf16, #tpu.memory_space<vmem>>, vector<8x18x32xbf16>
    %61 = vector.extract_strided_slice %60 {offsets = [0, 0, 0], sizes = [8, 16, 32], strides = [1, 1, 1]} : vector<8x18x32xbf16> to vector<8x16x32xbf16>
    %62 = vector.extract_strided_slice %60 {offsets = [0, 1, 0], sizes = [8, 16, 32], strides = [1, 1, 1]} : vector<8x18x32xbf16> to vector<8x16x32xbf16>
    %63 = vector.extract_strided_slice %60 {offsets = [0, 2, 0], sizes = [8, 16, 32], strides = [1, 1, 1]} : vector<8x18x32xbf16> to vector<8x16x32xbf16>
    %64 = tpu.concatenate %61, %62, %63 in 2 : vector<8x16x32xbf16>, vector<8x16x32xbf16>, vector<8x16x32xbf16> -> vector<8x16x96xbf16>
    %65 = vector.shape_cast %64 : vector<8x16x96xbf16> to vector<128x96xbf16>
    %c1_46 = arith.constant 1 : index
    %c0_47 = arith.constant 0 : index
    %c0_48 = arith.constant 0 : index
    %66 = vector.load %arg10[%c1_46, %c0_47, %c0_48] : memref<3x96x32xbf16, #tpu.memory_space<vmem>>, vector<1x96x32xbf16>
    %67 = vector.shape_cast %66 : vector<1x96x32xbf16> to vector<96x32xbf16>
    %cst_49 = arith.constant dense<0.000000e+00> : vector<128x32xf32>
    %68 = tpu.matmul %65, %67, %cst_49 {dimension_numbers = #tpu.dot_dimension_numbers<[1], [0], [0], [1], [0, 0, 1, 1], [], []>} : vector<128x96xbf16>, vector<96x32xbf16>, vector<128x32xf32> -> vector<128x32xf32>
    %c0_50 = arith.constant 0 : index
    %c0_51 = arith.constant 0 : index
    %69 = vector.load %arg16[%c0_50, %c0_51] : memref<128x32xf32, #tpu.memory_space<vmem>>, vector<128x32xf32>
    %70 = arith.addf %69, %68 : vector<128x32xf32>
    %c0_52 = arith.constant 0 : index
    %c0_53 = arith.constant 0 : index
    %71 = vector.load %arg16[%c0_52, %c0_53] : memref<128x32xf32, #tpu.memory_space<vmem>>, vector<128x32xf32>
    tpu.vector_store %arg16[%c0_52, %c0_53], %70 {strides = array<i32>} : memref<128x32xf32, #tpu.memory_space<vmem>>, vector<128x32xf32>,
    %c2 = arith.constant 2 : index
    %c0_54 = arith.constant 0 : index
    %c0_55 = arith.constant 0 : index
    %72 = vector.load %arg15[%c2, %c0_54, %c0_55] : memref<10x18x32xbf16, #tpu.memory_space<vmem>>, vector<8x18x32xbf16>
    %73 = vector.extract_strided_slice %72 {offsets = [0, 0, 0], sizes = [8, 16, 32], strides = [1, 1, 1]} : vector<8x18x32xbf16> to vector<8x16x32xbf16>
    %74 = vector.extract_strided_slice %72 {offsets = [0, 1, 0], sizes = [8, 16, 32], strides = [1, 1, 1]} : vector<8x18x32xbf16> to vector<8x16x32xbf16>
    %75 = vector.extract_strided_slice %72 {offsets = [0, 2, 0], sizes = [8, 16, 32], strides = [1, 1, 1]} : vector<8x18x32xbf16> to vector<8x16x32xbf16>
    %76 = tpu.concatenate %73, %74, %75 in 2 : vector<8x16x32xbf16>, vector<8x16x32xbf16>, vector<8x16x32xbf16> -> vector<8x16x96xbf16>
    %77 = vector.shape_cast %76 : vector<8x16x96xbf16> to vector<128x96xbf16>
    %c2_56 = arith.constant 2 : index
    %c0_57 = arith.constant 0 : index
    %c0_58 = arith.constant 0 : index
    %78 = vector.load %arg10[%c2_56, %c0_57, %c0_58] : memref<3x96x32xbf16, #tpu.memory_space<vmem>>, vector<1x96x32xbf16>
    %79 = vector.shape_cast %78 : vector<1x96x32xbf16> to vector<96x32xbf16>
    %cst_59 = arith.constant dense<0.000000e+00> : vector<128x32xf32>
    %80 = tpu.matmul %77, %79, %cst_59 {dimension_numbers = #tpu.dot_dimension_numbers<[1], [0], [0], [1], [0, 0, 1, 1], [], []>} : vector<128x96xbf16>, vector<96x32xbf16>, vector<128x32xf32> -> vector<128x32xf32>
    %c0_60 = arith.constant 0 : index
    %c0_61 = arith.constant 0 : index
    %81 = vector.load %arg16[%c0_60, %c0_61] : memref<128x32xf32, #tpu.memory_space<vmem>>, vector<128x32xf32>
    %82 = arith.addf %81, %80 : vector<128x32xf32>
    %c0_62 = arith.constant 0 : index
    %c0_63 = arith.constant 0 : index
    %83 = vector.load %arg16[%c0_62, %c0_63] : memref<128x32xf32, #tpu.memory_space<vmem>>, vector<128x32xf32>
    tpu.vector_store %arg16[%c0_62, %c0_63], %82 {strides = array<i32>} : memref<128x32xf32, #tpu.memory_space<vmem>>, vector<128x32xf32>,
    %c0_64 = arith.constant 0 : index
    %c0_65 = arith.constant 0 : index
    %84 = vector.load %arg16[%c0_64, %c0_65] : memref<128x32xf32, #tpu.memory_space<vmem>>, vector<128x32xf32>
    %c0_66 = arith.constant 0 : index
    %c0_67 = arith.constant 0 : index
    %85 = vector.load %arg11[%c0_66, %c0_67] : memref<1x32xf32, #tpu.memory_space<vmem>>, vector<1x32xf32>
    %86 = vector.broadcast %85 : vector<1x32xf32> to vector<128x32xf32>
    %87 = arith.mulf %84, %86 : vector<128x32xf32>
    %c0_68 = arith.constant 0 : index
    %c0_69 = arith.constant 0 : index
    %88 = vector.load %arg12[%c0_68, %c0_69] : memref<1x32xf32, #tpu.memory_space<vmem>>, vector<1x32xf32>
    %89 = vector.broadcast %88 : vector<1x32xf32> to vector<128x32xf32>
    %90 = arith.addf %87, %89 : vector<128x32xf32>
    %cst_70 = arith.constant 0.000000e+00 : f32
    %91 = vector.broadcast %cst_70 : f32 to vector<128x32xf32>
    %92 = arith.maximumf %90, %91 : vector<128x32xf32>
    %93 = arith.truncf %92 : vector<128x32xf32> to vector<128x32xbf16>
    %c0_71 = arith.constant 0 : index
    %c0_72 = arith.constant 0 : index
    %94 = vector.load %arg13[%c0_71, %c0_72] : memref<32x128xbf16, #tpu.memory_space<vmem>>, vector<32x128xbf16>
    %cst_73 = arith.constant dense<0.000000e+00> : vector<128x128xf32>
    %95 = tpu.matmul %93, %94, %cst_73 {dimension_numbers = #tpu.dot_dimension_numbers<[1], [0], [0], [1], [0, 0, 1, 1], [], []>} : vector<128x32xbf16>, vector<32x128xbf16>, vector<128x128xf32> -> vector<128x128xf32>
    %96 = vector.shape_cast %95 : vector<128x128xf32> to vector<1x8x16x128xf32>
    %c0_74 = arith.constant 0 : index
    %c0_75 = arith.constant 0 : index
    %c0_76 = arith.constant 0 : index
    %c0_77 = arith.constant 0 : index
    %97 = vector.load %arg3[%c0_74, %c0_75, %c0_76, %c0_77] : memref<1x8x16x128xf32, #tpu.memory_space<vmem>>, vector<1x8x16x128xf32>
    %98 = arith.addf %96, %97 : vector<1x8x16x128xf32>
    %c0_78 = arith.constant 0 : index
    %c0_79 = arith.constant 0 : index
    %c0_80 = arith.constant 0 : index
    %c0_81 = arith.constant 0 : index
    %99 = vector.load %arg14[%c0_78, %c0_79, %c0_80, %c0_81] : memref<1x8x16x128xf32, #tpu.memory_space<vmem>>, vector<1x8x16x128xf32>
    tpu.vector_store %arg14[%c0_78, %c0_79, %c0_80, %c0_81], %98 {strides = array<i32>} : memref<1x8x16x128xf32, #tpu.memory_space<vmem>>, vector<1x8x16x128xf32>,
    return
  }
  func.func @transform_0(%arg0: i32, %arg1: i32) -> (i32, i32, i32, i32) {
    %c8_i32 = arith.constant 8 : i32
    %0 = arith.muli %arg1, %c8_i32 : i32
    %c1_i32 = arith.constant 1 : i32
    %1 = arith.subi %0, %c1_i32 : i32
    %c0_i32 = arith.constant 0 : i32
    %2 = arith.maxsi %1, %c0_i32 : i32
    %c0_i32_0 = arith.constant 0 : i32
    %c0_i32_1 = arith.constant 0 : i32
    %c0_i32_2 = arith.constant 0 : i32
    return %arg0, %2, %c0_i32_0, %c0_i32_1 : i32, i32, i32, i32
  }
  func.func @transform_1(%arg0: i32, %arg1: i32) -> (i32, i32, i32, i32) {
    %c0_i32 = arith.constant 0 : i32
    %c0_i32_0 = arith.constant 0 : i32
    %c0_i32_1 = arith.constant 0 : i32
    return %arg0, %arg1, %c0_i32, %c0_i32_0 : i32, i32, i32, i32
  }
  func.func @transform_2(%arg0: i32, %arg1: i32) -> (i32, i32, i32, i32) {
    %c1_i32 = arith.constant 1 : i32
    %0 = arith.addi %arg1, %c1_i32 : i32
    %c8_i32 = arith.constant 8 : i32
    %1 = arith.muli %0, %c8_i32 : i32
    %c15_i32 = arith.constant 15 : i32
    %2 = arith.minsi %1, %c15_i32 : i32
    %c0_i32 = arith.constant 0 : i32
    %c0_i32_0 = arith.constant 0 : i32
    %c0_i32_1 = arith.constant 0 : i32
    return %arg0, %2, %c0_i32, %c0_i32_0 : i32, i32, i32, i32
  }
  func.func @transform_3(%arg0: i32, %arg1: i32) -> (i32, i32) {
    %c0_i32 = arith.constant 0 : i32
    %c0_i32_0 = arith.constant 0 : i32
    %c0_i32_1 = arith.constant 0 : i32
    return %c0_i32, %c0_i32_0 : i32, i32
  }
  func.func @transform_4(%arg0: i32, %arg1: i32) -> (i32, i32) {
    %c0_i32 = arith.constant 0 : i32
    %c0_i32_0 = arith.constant 0 : i32
    %c0_i32_1 = arith.constant 0 : i32
    return %c0_i32, %c0_i32_0 : i32, i32
  }
  func.func @transform_5(%arg0: i32, %arg1: i32) -> (i32, i32) {
    %c0_i32 = arith.constant 0 : i32
    %c0_i32_0 = arith.constant 0 : i32
    %c0_i32_1 = arith.constant 0 : i32
    return %c0_i32, %c0_i32_0 : i32, i32
  }
  func.func @transform_6(%arg0: i32, %arg1: i32) -> (i32, i32) {
    %c0_i32 = arith.constant 0 : i32
    %c0_i32_0 = arith.constant 0 : i32
    %c0_i32_1 = arith.constant 0 : i32
    return %c0_i32, %c0_i32_0 : i32, i32
  }
  func.func @transform_7(%arg0: i32, %arg1: i32) -> (i32, i32) {
    %c0_i32 = arith.constant 0 : i32
    %c0_i32_0 = arith.constant 0 : i32
    %c0_i32_1 = arith.constant 0 : i32
    return %c0_i32, %c0_i32_0 : i32, i32
  }
  func.func @transform_8(%arg0: i32, %arg1: i32) -> (i32, i32, i32) {
    %c0_i32 = arith.constant 0 : i32
    %c0_i32_0 = arith.constant 0 : i32
    %c0_i32_1 = arith.constant 0 : i32
    %c0_i32_2 = arith.constant 0 : i32
    return %c0_i32, %c0_i32_0, %c0_i32_1 : i32, i32, i32
  }
  func.func @transform_9(%arg0: i32, %arg1: i32) -> (i32, i32) {
    %c0_i32 = arith.constant 0 : i32
    %c0_i32_0 = arith.constant 0 : i32
    %c0_i32_1 = arith.constant 0 : i32
    return %c0_i32, %c0_i32_0 : i32, i32
  }
  func.func @transform_10(%arg0: i32, %arg1: i32) -> (i32, i32) {
    %c0_i32 = arith.constant 0 : i32
    %c0_i32_0 = arith.constant 0 : i32
    %c0_i32_1 = arith.constant 0 : i32
    return %c0_i32, %c0_i32_0 : i32, i32
  }
  func.func @transform_11(%arg0: i32, %arg1: i32) -> (i32, i32) {
    %c0_i32 = arith.constant 0 : i32
    %c0_i32_0 = arith.constant 0 : i32
    %c0_i32_1 = arith.constant 0 : i32
    return %c0_i32, %c0_i32_0 : i32, i32
  }
  func.func @transform_12(%arg0: i32, %arg1: i32) -> (i32, i32, i32, i32) {
    %c0_i32 = arith.constant 0 : i32
    %c0_i32_0 = arith.constant 0 : i32
    %c0_i32_1 = arith.constant 0 : i32
    return %arg0, %arg1, %c0_i32, %c0_i32_0 : i32, i32, i32, i32
  }
}

</mosaic_0001>

<llo_original>
// kernel: tpu_custom_call.1
$region0: #{tpu_custom_call.1}
  #allocation0 [shape = 'u32[]', space=smem, size = 0x4, offset = 0x4, fixed_abs, tag = 'smem constant byte address 0x4 - core index']
  #allocation1 [shape = 'u32[72,128]{1,0:T(1,128)}', space=vmem, size = 0x9000, scoped, tag = 'internal scratch']
  #allocation2 [shape = 'bf16[10,18,32]{2,1,0:T(8,128)(2,1)}', space=vmem, size = 0xf000, scoped, tag = 'scratch operand']
  #allocation3 [shape = 'f32[128,32]{1,0:T(8,128)}', space=vmem, size = 0x10000, scoped, tag = 'scratch operand']
  %s0 = inlined_call_operand.hbm [shape: f32[2,16,16,128], index: 0, kind: input, shape index: {}]
  %s1 = inlined_call_operand.hbm [shape: f32[2,16,16,128], index: 1, kind: input, shape index: {}]
  %s2 = inlined_call_operand.hbm [shape: f32[2,16,16,128], index: 2, kind: input, shape index: {}]
  %s3 = inlined_call_operand.vmem [shape: f32[1,128], index: 3, kind: input, shape index: {}]
  %s4 = inlined_call_operand.vmem [shape: f32[1,128], index: 4, kind: input, shape index: {}]
  %s5 = inlined_call_operand.vmem [shape: bf16[128,32], index: 5, kind: input, shape index: {}]
  %s6 = inlined_call_operand.vmem [shape: f32[1,32], index: 6, kind: input, shape index: {}]
  %s7 = inlined_call_operand.vmem [shape: f32[1,32], index: 7, kind: input, shape index: {}]
  %s8 = inlined_call_operand.vmem [shape: bf16[3,96,32], index: 8, kind: input, shape index: {}]
  %s9 = inlined_call_operand.vmem [shape: f32[1,32], index: 9, kind: input, shape index: {}]
  %s10 = inlined_call_operand.vmem [shape: f32[1,32], index: 10, kind: input, shape index: {}]
  %s11 = inlined_call_operand.vmem [shape: bf16[32,128], index: 11, kind: input, shape index: {}]
  %s12 = inlined_call_operand.hbm [shape: f32[2,16,16,128], index: 12, kind: output, shape index: {}]
  %s13 = sld [smem:[#allocation0]]
  $region93: #{tpu_custom_call.1} parent=0
    _
  %s15 = ssub.s32 1, %s13
  %s16 = scalar_select 0, %s15, %s13
  $region1: #{tpu_custom_call.1} parent=0
    #allocation4 [shape = 'u8[16384]{0}', space=vmem, size = 0x4000, scoped, tag = 'input window, operand 0']
    #allocation5 [shape = 's32[2]{0}', space=sflag, size = 0x8, scoped, tag = 'scoped memory for tpu_custom_call.1']
    #allocation6 [shape = 's32[2]{0}', space=sflag, size = 0x8, scoped, tag = 'scoped memory for tpu_custom_call.1']
    #allocation7 [shape = 'u8[131072]{0}', space=vmem, size = 0x20000, scoped, tag = 'input window, operand 1']
    #allocation8 [shape = 's32[2]{0}', space=sflag, size = 0x8, scoped, tag = 'scoped memory for tpu_custom_call.1']
    #allocation9 [shape = 'u8[16384]{0}', space=vmem, size = 0x4000, scoped, tag = 'input window, operand 2']
    #allocation10 [shape = 'u8[131072]{0}', space=vmem, size = 0x20000, scoped, tag = 'output window, operand 0']
    %17 = vsyncpa [#allocation5], 0
    %s18 = scalar_lea.sflag [#allocation5], 1
    %19 = vsyncpa %s18, 0
    %20 = vsyncpa [#allocation8], 0
    %s21 = scalar_lea.sflag [#allocation8], 1
    %22 = vsyncpa %s21, 0
    %23 = vsyncpa [#allocation6], 0
    %s24 = scalar_lea.sflag [#allocation6], 1
    %25 = vsyncpa %s24, 0
    loop: start=0, step=1, limit=6
    $region2: #{tpu_custom_call.1} parent=1 // loop_pre_header
      _
    $region3: #{tpu_custom_call.1} parent=1 // loop_header
      %s27 = sphi 0, %s31
      %p28 = scmp.ge.s32.totalorder %s27, 6
      %s34 = sphi 0, %s46
      %s35 = sphi 0, %s42
      %s36 = sphi 0, %s34
      %s37 = sphi 0, %s35
      %s38 = sphi 0, %s36
      %s39 = sphi 0, %s37
      %s59 = sphi 0, %s61
      %s62 = sphi 0, %s59
      %s63 = sphi 0, %s62
      %s79 = sphi 0, %s63
      %s87 = sphi 0, %s89
      %s90 = sphi 0, %s87
      %s91 = sphi 0, %s90
      %s107 = sphi 0, %s91
      %s123 = sphi 0, %s125
      %s126 = sphi 0, %s123
      %s127 = sphi 0, %s126
      %s143 = sphi 0, %s127
      %s147 = sphi 0, %s147
      %s149 = sphi 0, %s147
      %s150 = sphi 0, %s149
      %s164 = sphi 0, %s150
      %s168 = sphi 0, %s168
      %s170 = sphi 0, %s168
      %s171 = sphi 0, %s170
      %s185 = sphi 0, %s171
      %s189 = sphi 0, %s189
      %s191 = sphi 0, %s189
      %s192 = sphi 0, %s191
      %s206 = sphi 0, %s192
      %s210 = sphi 0, %s210
      %s212 = sphi 0, %s210
      %s213 = sphi 0, %s212
      %s227 = sphi 0, %s213
      %s231 = sphi 0, %s231
      %s233 = sphi 0, %s231
      %s234 = sphi 0, %s233
      %s248 = sphi 0, %s234
      %s252 = sphi 0, %s252
      %s254 = sphi 0, %s252
      %s255 = sphi 0, %s254
      %s269 = sphi 0, %s255
      %s273 = sphi 0, %s273
      %s275 = sphi 0, %s273
      %s276 = sphi 0, %s275
      %s290 = sphi 0, %s276
      %s294 = sphi 0, %s294
      %s296 = sphi 0, %s294
      %s297 = sphi 0, %s296
      %s311 = sphi 0, %s297
      %s315 = sphi 0, %s315
      %s317 = sphi 0, %s315
      %s318 = sphi 0, %s317
      %s332 = sphi 0, %s318
      %s340 = sphi 0, %s342
      %s343 = sphi 0, %s340
      %s344 = sphi 0, %s343
      %s360 = sphi 0, %s344
    $region4: #{tpu_custom_call.1} parent=1 // loop_header_branch
      %30 = sbr.rel (%p28) target = $region8
    $region5: #{tpu_custom_call.1} parent=1 // loop_body
      %s32 = ssub.s32 %s27, 1
      %s33 = ssub.s32 %s27, 2
      %s40 = sadd.s32 1, %s35
      %p41 = scmp.ge.s32.totalorder %s40, 2
      %s42 = scalar_select %p41, 0, %s40
      %s43 = sadd.s32 1, %s34
      %s44 = scalar_select %p41, %s43, %s34
      %p45 = scmp.ge.s32.totalorder %s44, 2
      %s46 = scalar_select %p45, 0, %s44
      %s47 = smul.u32 %s35, 8
      %s48 = ssub.s32 %s47, 1
      %p49 = scmp.gt.s32.totalorder %s48, 0
      %s50 = scalar_select %p49, %s48, 0
      %s51 = smul.u32 %s42, 8
      %s52 = ssub.s32 %s51, 1
      %p53 = scmp.gt.s32.totalorder %s52, 0
      %s54 = scalar_select %p53, %s52, 0
      %s55 = ssub.s32 %s34, %s46
      %s56 = ssub.s32 %s50, %s54
      %s57 = sor.u32 %s55, %s56
      %p58 = scmp.eq.s32.totalorder %s57, 0
      %s60 = sadd.s32 %s59, 1
      %s61 = scalar_select %p58, %s59, %s60
      %p64 = pneg %p58
      %p65 = scmp.eq.s32.totalorder %s27, 3
      %p66 = por %p64, %p65
      %p67 = scmp.ne.s32.totalorder %s59, %s62
      %p68 = scmp.eq.s32.totalorder %s27, 0
      %p69 = por %p67, %p68
      %p70 = scmp.ne.s32.totalorder %s59, %s62
      %p71 = scmp.eq.s32.totalorder %s32, 3
      %p72 = por %p70, %p71
      %p73 = scmp.ne.s32.totalorder %s62, %s63
      %p74 = scmp.eq.s32.totalorder %s32, 0
      %p75 = por %p73, %p74
      %p76 = scmp.ne.s32.totalorder %s62, %s63
      %p77 = scmp.eq.s32.totalorder %s33, 3
      %p78 = por %p76, %p77
      %p80 = scmp.ne.s32.totalorder %s63, %s79
      %p81 = scmp.eq.s32.totalorder %s33, 0
      %p82 = por %p80, %p81
      %s83 = ssub.s32 %s34, %s46
      %s84 = ssub.s32 %s35, %s42
      %s85 = sor.u32 %s83, %s84
      %p86 = scmp.eq.s32.totalorder %s85, 0
      %s88 = sadd.s32 %s87, 1
      %s89 = scalar_select %p86, %s87, %s88
      %p92 = pneg %p86
      %p93 = scmp.eq.s32.totalorder %s27, 3
      %p94 = por %p92, %p93
      %p95 = scmp.ne.s32.totalorder %s87, %s90
      %p96 = scmp.eq.s32.totalorder %s27, 0
      %p97 = por %p95, %p96
      %p98 = scmp.ne.s32.totalorder %s87, %s90
      %p99 = scmp.eq.s32.totalorder %s32, 3
      %p100 = por %p98, %p99
      %p101 = scmp.ne.s32.totalorder %s90, %s91
      %p102 = scmp.eq.s32.totalorder %s32, 0
      %p103 = por %p101, %p102
      %p104 = scmp.ne.s32.totalorder %s90, %s91
      %p105 = scmp.eq.s32.totalorder %s33, 3
      %p106 = por %p104, %p105
      %p108 = scmp.ne.s32.totalorder %s91, %s107
      %p109 = scmp.eq.s32.totalorder %s33, 0
      %p110 = por %p108, %p109
      %s111 = sadd.s32 %s35, 1
      %s112 = smul.u32 %s111, 8
      %p113 = scmp.lt.s32.totalorder %s112, 15
      %s114 = scalar_select %p113, %s112, 15
      %s115 = sadd.s32 %s42, 1
      %s116 = smul.u32 %s115, 8
      %p117 = scmp.lt.s32.totalorder %s116, 15
      %s118 = scalar_select %p117, %s116, 15
      %s119 = ssub.s32 %s34, %s46
      %s120 = ssub.s32 %s114, %s118
      %s121 = sor.u32 %s119, %s120
      %p122 = scmp.eq.s32.totalorder %s121, 0
      %s124 = sadd.s32 %s123, 1
      %s125 = scalar_select %p122, %s123, %s124
      %p128 = pneg %p122
      %p129 = scmp.eq.s32.totalorder %s27, 3
      %p130 = por %p128, %p129
      %p131 = scmp.ne.s32.totalorder %s123, %s126
      %p132 = scmp.eq.s32.totalorder %s27, 0
      %p133 = por %p131, %p132
      %p134 = scmp.ne.s32.totalorder %s123, %s126
      %p135 = scmp.eq.s32.totalorder %s32, 3
      %p136 = por %p134, %p135
      %p137 = scmp.ne.s32.totalorder %s126, %s127
      %p138 = scmp.eq.s32.totalorder %s32, 0
      %p139 = por %p137, %p138
      %p140 = scmp.ne.s32.totalorder %s126, %s127
      %p141 = scmp.eq.s32.totalorder %s33, 3
      %p142 = por %p140, %p141
      %p144 = scmp.ne.s32.totalorder %s127, %s143
      %p145 = scmp.eq.s32.totalorder %s33, 0
      %p146 = por %p144, %p145
      %s148 = sadd.s32 %s147, 1
      %p151 = scmp.eq.s32.totalorder %s27, 3
      %p152 = scmp.ne.s32.totalorder %s147, %s149
      %p153 = scmp.eq.s32.totalorder %s27, 0
      %p154 = por %p152, %p153
      %p155 = scmp.ne.s32.totalorder %s147, %s149
      %p156 = scmp.eq.s32.totalorder %s32, 3
      %p157 = por %p155, %p156
      %p158 = scmp.ne.s32.totalorder %s149, %s150
      %p159 = scmp.eq.s32.totalorder %s32, 0
      %p160 = por %p158, %p159
      %p161 = scmp.ne.s32.totalorder %s149, %s150
      %p162 = scmp.eq.s32.totalorder %s33, 3
      %p163 = por %p161, %p162
      %p165 = scmp.ne.s32.totalorder %s150, %s164
      %p166 = scmp.eq.s32.totalorder %s33, 0
      %p167 = por %p165, %p166
      %s169 = sadd.s32 %s168, 1
      %p172 = scmp.eq.s32.totalorder %s27, 3
      %p173 = scmp.ne.s32.totalorder %s168, %s170
      %p174 = scmp.eq.s32.totalorder %s27, 0
      %p175 = por %p173, %p174
      %p176 = scmp.ne.s32.totalorder %s168, %s170
      %p177 = scmp.eq.s32.totalorder %s32, 3
      %p178 = por %p176, %p177
      %p179 = scmp.ne.s32.totalorder %s170, %s171
      %p180 = scmp.eq.s32.totalorder %s32, 0
      %p181 = por %p179, %p180
      %p182 = scmp.ne.s32.totalorder %s170, %s171
      %p183 = scmp.eq.s32.totalorder %s33, 3
      %p184 = por %p182, %p183
      %p186 = scmp.ne.s32.totalorder %s171, %s185
      %p187 = scmp.eq.s32.totalorder %s33, 0
      %p188 = por %p186, %p187
      %s190 = sadd.s32 %s189, 1
      %p193 = scmp.eq.s32.totalorder %s27, 3
      %p194 = scmp.ne.s32.totalorder %s189, %s191
      %p195 = scmp.eq.s32.totalorder %s27, 0
      %p196 = por %p194, %p195
      %p197 = scmp.ne.s32.totalorder %s189, %s191
      %p198 = scmp.eq.s32.totalorder %s32, 3
      %p199 = por %p197, %p198
      %p200 = scmp.ne.s32.totalorder %s191, %s192
      %p201 = scmp.eq.s32.totalorder %s32, 0
      %p202 = por %p200, %p201
      %p203 = scmp.ne.s32.totalorder %s191, %s192
      %p204 = scmp.eq.s32.totalorder %s33, 3
      %p205 = por %p203, %p204
      %p207 = scmp.ne.s32.totalorder %s192, %s206
      %p208 = scmp.eq.s32.totalorder %s33, 0
      %p209 = por %p207, %p208
      %s211 = sadd.s32 %s210, 1
      %p214 = scmp.eq.s32.totalorder %s27, 3
      %p215 = scmp.ne.s32.totalorder %s210, %s212
      %p216 = scmp.eq.s32.totalorder %s27, 0
      %p217 = por %p215, %p216
      %p218 = scmp.ne.s32.totalorder %s210, %s212
      %p219 = scmp.eq.s32.totalorder %s32, 3
      %p220 = por %p218, %p219
      %p221 = scmp.ne.s32.totalorder %s212, %s213
      %p222 = scmp.eq.s32.totalorder %s32, 0
      %p223 = por %p221, %p222
      %p224 = scmp.ne.s32.totalorder %s212, %s213
      %p225 = scmp.eq.s32.totalorder %s33, 3
      %p226 = por %p224, %p225
      %p228 = scmp.ne.s32.totalorder %s213, %s227
      %p229 = scmp.eq.s32.totalorder %s33, 0
      %p230 = por %p228, %p229
      %s232 = sadd.s32 %s231, 1
      %p235 = scmp.eq.s32.totalorder %s27, 3
      %p236 = scmp.ne.s32.totalorder %s231, %s233
      %p237 = scmp.eq.s32.totalorder %s27, 0
      %p238 = por %p236, %p237
      %p239 = scmp.ne.s32.totalorder %s231, %s233
      %p240 = scmp.eq.s32.totalorder %s32, 3
      %p241 = por %p239, %p240
      %p242 = scmp.ne.s32.totalorder %s233, %s234
      %p243 = scmp.eq.s32.totalorder %s32, 0
      %p244 = por %p242, %p243
      %p245 = scmp.ne.s32.totalorder %s233, %s234
      %p246 = scmp.eq.s32.totalorder %s33, 3
      %p247 = por %p245, %p246
      %p249 = scmp.ne.s32.totalorder %s234, %s248
      %p250 = scmp.eq.s32.totalorder %s33, 0
      %p251 = por %p249, %p250
      %s253 = sadd.s32 %s252, 1
      %p256 = scmp.eq.s32.totalorder %s27, 3
      %p257 = scmp.ne.s32.totalorder %s252, %s254
      %p258 = scmp.eq.s32.totalorder %s27, 0
      %p259 = por %p257, %p258
      %p260 = scmp.ne.s32.totalorder %s252, %s254
      %p261 = scmp.eq.s32.totalorder %s32, 3
      %p262 = por %p260, %p261
      %p263 = scmp.ne.s32.totalorder %s254, %s255
      %p264 = scmp.eq.s32.totalorder %s32, 0
      %p265 = por %p263, %p264
      %p266 = scmp.ne.s32.totalorder %s254, %s255
      %p267 = scmp.eq.s32.totalorder %s33, 3
      %p268 = por %p266, %p267
      %p270 = scmp.ne.s32.totalorder %s255, %s269
      %p271 = scmp.eq.s32.totalorder %s33, 0
      %p272 = por %p270, %p271
      %s274 = sadd.s32 %s273, 1
      %p277 = scmp.eq.s32.totalorder %s27, 3
      %p278 = scmp.ne.s32.totalorder %s273, %s275
      %p279 = scmp.eq.s32.totalorder %s27, 0
      %p280 = por %p278, %p279
      %p281 = scmp.ne.s32.totalorder %s273, %s275
      %p282 = scmp.eq.s32.totalorder %s32, 3
      %p283 = por %p281, %p282
      %p284 = scmp.ne.s32.totalorder %s275, %s276
      %p285 = scmp.eq.s32.totalorder %s32, 0
      %p286 = por %p284, %p285
      %p287 = scmp.ne.s32.totalorder %s275, %s276
      %p288 = scmp.eq.s32.totalorder %s33, 3
      %p289 = por %p287, %p288
      %p291 = scmp.ne.s32.totalorder %s276, %s290
      %p292 = scmp.eq.s32.totalorder %s33, 0
      %p293 = por %p291, %p292
      %s295 = sadd.s32 %s294, 1
      %p298 = scmp.eq.s32.totalorder %s27, 3
      %p299 = scmp.ne.s32.totalorder %s294, %s296
      %p300 = scmp.eq.s32.totalorder %s27, 0
      %p301 = por %p299, %p300
      %p302 = scmp.ne.s32.totalorder %s294, %s296
      %p303 = scmp.eq.s32.totalorder %s32, 3
      %p304 = por %p302, %p303
      %p305 = scmp.ne.s32.totalorder %s296, %s297
      %p306 = scmp.eq.s32.totalorder %s32, 0
      %p307 = por %p305, %p306
      %p308 = scmp.ne.s32.totalorder %s296, %s297
      %p309 = scmp.eq.s32.totalorder %s33, 3
      %p310 = por %p308, %p309
      %p312 = scmp.ne.s32.totalorder %s297, %s311
      %p313 = scmp.eq.s32.totalorder %s33, 0
      %p314 = por %p312, %p313
      %s316 = sadd.s32 %s315, 1
      %p319 = scmp.eq.s32.totalorder %s27, 3
      %p320 = scmp.ne.s32.totalorder %s315, %s317
      %p321 = scmp.eq.s32.totalorder %s27, 0
      %p322 = por %p320, %p321
      %p323 = scmp.ne.s32.totalorder %s315, %s317
      %p324 = scmp.eq.s32.totalorder %s32, 3
      %p325 = por %p323, %p324
      %p326 = scmp.ne.s32.totalorder %s317, %s318
      %p327 = scmp.eq.s32.totalorder %s32, 0
      %p328 = por %p326, %p327
      %p329 = scmp.ne.s32.totalorder %s317, %s318
      %p330 = scmp.eq.s32.totalorder %s33, 3
      %p331 = por %p329, %p330
      %p333 = scmp.ne.s32.totalorder %s318, %s332
      %p334 = scmp.eq.s32.totalorder %s33, 0
      %p335 = por %p333, %p334
      %s336 = ssub.s32 %s34, %s46
      %s337 = ssub.s32 %s35, %s42
      %s338 = sor.u32 %s336, %s337
      %p339 = scmp.eq.s32.totalorder %s338, 0
      %s341 = sadd.s32 %s340, 1
      %s342 = scalar_select %p339, %s340, %s341
      %p345 = pneg %p339
      %p346 = scmp.eq.s32.totalorder %s27, 3
      %p347 = por %p345, %p346
      %p348 = scmp.ne.s32.totalorder %s340, %s343
      %p349 = scmp.eq.s32.totalorder %s27, 0
      %p350 = por %p348, %p349
      %p351 = scmp.ne.s32.totalorder %s340, %s343
      %p352 = scmp.eq.s32.totalorder %s32, 3
      %p353 = por %p351, %p352
      %p354 = scmp.ne.s32.totalorder %s343, %s344
      %p355 = scmp.eq.s32.totalorder %s32, 0
      %p356 = por %p354, %p355
      %p357 = scmp.ne.s32.totalorder %s343, %s344
      %p358 = scmp.eq.s32.totalorder %s33, 3
      %p359 = por %p357, %p358
      %p361 = scmp.ne.s32.totalorder %s344, %s360
      %p362 = scmp.eq.s32.totalorder %s33, 0
      %p363 = por %p361, %p362
      %p364 = scmp.le.s32.totalorder 1, %s27
      %p365 = scmp.lt.s32.totalorder %s27, 5
      %p366 = pnand %p364, %p365
      %p367 = pneg %p366
      // Predicated region
      $region9: #{tpu_custom_call.1} parent=5 // pred_check
        _
      $region10: #{tpu_custom_call.1} parent=5 // pred_check_branch
        %369 = sbr.rel (%p366) target = $region12
      $region11: #{tpu_custom_call.1} parent=5 // pred_region
        %s370 = ssub.s32 %s27, 1
        // Predicated region
        $region13: #{tpu_custom_call.1} parent=11 // pred_check
          %p371 = pneg %p160
        $region14: #{tpu_custom_call.1} parent=11 // pred_check_branch
          %373 = sbr.rel (%p371) target = $region16
        $region15: #{tpu_custom_call.1} parent=11 // pred_region
          _
        $region16: #{tpu_custom_call.1} parent=11 // pred_fallthru
          _
        // Predicated region
        $region17: #{tpu_custom_call.1} parent=11 // pred_check
          %p374 = pneg %p181
        $region18: #{tpu_custom_call.1} parent=11 // pred_check_branch
          %376 = sbr.rel (%p374) target = $region20
        $region19: #{tpu_custom_call.1} parent=11 // pred_region
          _
        $region20: #{tpu_custom_call.1} parent=11 // pred_fallthru
          _
        // Predicated region
        $region21: #{tpu_custom_call.1} parent=11 // pred_check
          %p377 = pneg %p202
        $region22: #{tpu_custom_call.1} parent=11 // pred_check_branch
          %379 = sbr.rel (%p377) target = $region24
        $region23: #{tpu_custom_call.1} parent=11 // pred_region
          _
        $region24: #{tpu_custom_call.1} parent=11 // pred_fallthru
          _
        // Predicated region
        $region25: #{tpu_custom_call.1} parent=11 // pred_check
          %p380 = pneg %p223
        $region26: #{tpu_custom_call.1} parent=11 // pred_check_branch
          %382 = sbr.rel (%p380) target = $region28
        $region27: #{tpu_custom_call.1} parent=11 // pred_region
          _
        $region28: #{tpu_custom_call.1} parent=11 // pred_fallthru
          _
        // Predicated region
        $region29: #{tpu_custom_call.1} parent=11 // pred_check
          %p383 = pneg %p244
        $region30: #{tpu_custom_call.1} parent=11 // pred_check_branch
          %385 = sbr.rel (%p383) target = $region32
        $region31: #{tpu_custom_call.1} parent=11 // pred_region
          _
        $region32: #{tpu_custom_call.1} parent=11 // pred_fallthru
          _
        // Predicated region
        $region33: #{tpu_custom_call.1} parent=11 // pred_check
          %p386 = pneg %p265
        $region34: #{tpu_custom_call.1} parent=11 // pred_check_branch
          %388 = sbr.rel (%p386) target = $region36
        $region35: #{tpu_custom_call.1} parent=11 // pred_region
          _
        $region36: #{tpu_custom_call.1} parent=11 // pred_fallthru
          _
        // Predicated region
        $region37: #{tpu_custom_call.1} parent=11 // pred_check
          %p389 = pneg %p286
        $region38: #{tpu_custom_call.1} parent=11 // pred_check_branch
          %391 = sbr.rel (%p389) target = $region40
        $region39: #{tpu_custom_call.1} parent=11 // pred_region
          _
        $region40: #{tpu_custom_call.1} parent=11 // pred_fallthru
          _
        // Predicated region
        $region41: #{tpu_custom_call.1} parent=11 // pred_check
          %p392 = pneg %p307
        $region42: #{tpu_custom_call.1} parent=11 // pred_check_branch
          %394 = sbr.rel (%p392) target = $region44
        $region43: #{tpu_custom_call.1} parent=11 // pred_region
          _
        $region44: #{tpu_custom_call.1} parent=11 // pred_fallthru
          _
        // Predicated region
        $region45: #{tpu_custom_call.1} parent=11 // pred_check
          %p395 = pneg %p328
        $region46: #{tpu_custom_call.1} parent=11 // pred_check_branch
          %397 = sbr.rel (%p395) target = $region48
        $region47: #{tpu_custom_call.1} parent=11 // pred_region
          _
        $region48: #{tpu_custom_call.1} parent=11 // pred_fallthru
          _
      $region12: #{tpu_custom_call.1} parent=5 // pred_fallthru
        _
      %p398 = scmp.lt.s32.totalorder %s27, 4
      // Predicated region
      $region49: #{tpu_custom_call.1} parent=5 // pred_check
        %p399 = pneg %p398
      $region50: #{tpu_custom_call.1} parent=5 // pred_check_branch
        %401 = sbr.rel (%p399) target = $region52
      $region51: #{tpu_custom_call.1} parent=5 // pred_region
        // Predicated region
        $region53: #{tpu_custom_call.1} parent=51 // pred_check
          %p402 = pneg %p69
        $region54: #{tpu_custom_call.1} parent=51 // pred_check_branch
          %404 = sbr.rel (%p402) target = $region56
        $region55: #{tpu_custom_call.1} parent=51 // pred_region
          %s405 = sand.u32 %s59, 1
          %s406 = scalar_lea.sflag [#allocation5], %s405
          %s407 = sand.u32 %s59, 1
          %s408 = smul.addr %s407, 16
          %s409 = scalar_lea.vmem [#allocation4], %s408
          %s410 = smul.u32 %s35, 8
          %s411 = ssub.s32 %s410, 1
          %p412 = scmp.gt.s32.totalorder %s411, 0
          %s413 = scalar_select %p412, %s411, 0
          %415 = vsyncadd %s406, 0
          %s416 = smul.addr %s413, 2
          %s417 = smul.addr %s34, 32
          %s418 = sadd.s32 %s416, %s417
          %s419 = smul.addr %s418, 8
          %s420 = scalar_lea.hbm %s0, %s419
          %s421 = sshll.u32 %s420, 4
          %s422 = int_to_ptr.hbm [resolvable:$true] %s421
          %s423 = sshll.u32 %s409, 4
          %s424 = int_to_ptr.vmem [resolvable:$true] %s423
          %429 = dma.hbm_to_vmem [thread:$0]  %s422, 256, %s424, %s406, 128, 128, 8
        $region56: #{tpu_custom_call.1} parent=51 // pred_fallthru
          _
        // Predicated region
        $region57: #{tpu_custom_call.1} parent=51 // pred_check
          %p430 = pneg %p97
        $region58: #{tpu_custom_call.1} parent=51 // pred_check_branch
          %432 = sbr.rel (%p430) target = $region60
        $region59: #{tpu_custom_call.1} parent=51 // pred_region
          %s433 = sand.u32 %s27, 1
          %s434 = scalar_lea.sflag [#allocation8], %s433
          %s435 = sand.u32 %s87, 1
          %s436 = smul.addr %s435, 128
          %s437 = scalar_lea.vmem [#allocation7], %s436
          %s438 = smul.u32 8, %s35
          %440 = vsyncadd %s434, 0
          %s441 = smul.addr %s438, 2
          %s442 = smul.addr %s34, 32
          %s443 = sadd.s32 %s441, %s442
          %s444 = smul.addr %s443, 8
          %s445 = scalar_lea.hbm %s1, %s444
          %s446 = sshll.u32 %s445, 4
          %s447 = int_to_ptr.hbm [resolvable:$true] %s446
          %s448 = sshll.u32 %s437, 4
          %s449 = int_to_ptr.vmem [resolvable:$true] %s448
          %454 = dma.hbm_to_vmem [thread:$0]  %s447, 2048, %s449, %s434, 128, 128, 8
        $region60: #{tpu_custom_call.1} parent=51 // pred_fallthru
          _
        // Predicated region
        $region61: #{tpu_custom_call.1} parent=51 // pred_check
          %p455 = pneg %p133
        $region62: #{tpu_custom_call.1} parent=51 // pred_check_branch
          %457 = sbr.rel (%p455) target = $region64
        $region63: #{tpu_custom_call.1} parent=51 // pred_region
          %s458 = sand.u32 %s27, 1
          %s459 = scalar_lea.sflag [#allocation8], %s458
          %s460 = sand.u32 %s123, 1
          %s461 = smul.addr %s460, 16
          %s462 = scalar_lea.vmem [#allocation9], %s461
          %s463 = sadd.s32 %s35, 1
          %s464 = smul.u32 %s463, 8
          %p465 = scmp.lt.s32.totalorder %s464, 15
          %s466 = scalar_select %p465, %s464, 15
          %468 = vsyncadd %s459, 0
          %s469 = smul.addr %s466, 2
          %s470 = smul.addr %s34, 32
          %s471 = sadd.s32 %s469, %s470
          %s472 = smul.addr %s471, 8
          %s473 = scalar_lea.hbm %s2, %s472
          %s474 = sshll.u32 %s473, 4
          %s475 = int_to_ptr.hbm [resolvable:$true] %s474
          %s476 = sshll.u32 %s462, 4
          %s477 = int_to_ptr.vmem [resolvable:$true] %s476
          %482 = dma.hbm_to_vmem [thread:$0]  %s475, 256, %s477, %s459, 128, 128, 8
        $region64: #{tpu_custom_call.1} parent=51 // pred_fallthru
          _
      $region52: #{tpu_custom_call.1} parent=5 // pred_fallthru
        _
      %p483 = scmp.le.s32.totalorder 1, %s27
      %p484 = scmp.lt.s32.totalorder %s27, 5
      %p485 = pnand %p483, %p484
      %p486 = pneg %p485
      // Predicated region
      $region65: #{tpu_custom_call.1} parent=5 // pred_check
        _
      $region66: #{tpu_custom_call.1} parent=5 // pred_check_branch
        %488 = sbr.rel (%p485) target = $region68
      $region67: #{tpu_custom_call.1} parent=5 // pred_region
        %s489 = ssub.s32 %s27, 1
        %s490 = sand.u32 %s62, 1
        %s491 = scalar_lea.sflag [#allocation5], %s490
        %s492 = sand.u32 %s62, 1
        %s493 = smul.addr %s492, 16
        %s494 = scalar_lea.vmem [#allocation4], %s493
        // Predicated region
        $region69: #{tpu_custom_call.1} parent=67 // pred_check
          %p495 = pneg %p75
        $region70: #{tpu_custom_call.1} parent=67 // pred_check_branch
          %497 = sbr.rel (%p495) target = $region72
        $region71: #{tpu_custom_call.1} parent=67 // pred_region
          %499 = dma.done %s491, 256
        $region72: #{tpu_custom_call.1} parent=67 // pred_fallthru
          _
        %s500 = sand.u32 %s32, 1
        %s501 = scalar_lea.sflag [#allocation8], %s500
        %s502 = sand.u32 %s90, 1
        %s503 = smul.addr %s502, 128
        %s504 = scalar_lea.vmem [#allocation7], %s503
        // Predicated region
        $region73: #{tpu_custom_call.1} parent=67 // pred_check
          %p505 = pneg %p103
        $region74: #{tpu_custom_call.1} parent=67 // pred_check_branch
          %507 = sbr.rel (%p505) target = $region76
        $region75: #{tpu_custom_call.1} parent=67 // pred_region
          %509 = dma.done %s501, 2048
        $region76: #{tpu_custom_call.1} parent=67 // pred_fallthru
          _
        %s510 = sand.u32 %s32, 1
        %s511 = scalar_lea.sflag [#allocation8], %s510
        %s512 = sand.u32 %s126, 1
        %s513 = smul.addr %s512, 16
        %s514 = scalar_lea.vmem [#allocation9], %s513
        // Predicated region
        $region77: #{tpu_custom_call.1} parent=67 // pred_check
          %p515 = pneg %p139
        $region78: #{tpu_custom_call.1} parent=67 // pred_check_branch
          %517 = sbr.rel (%p515) target = $region80
        $region79: #{tpu_custom_call.1} parent=67 // pred_region
          %519 = dma.done %s511, 256
        $region80: #{tpu_custom_call.1} parent=67 // pred_fallthru
          _
        %s520 = sand.u32 %s62, 1
        %s521 = scalar_lea.sflag [#allocation5], %s520
        %s522 = sand.u32 %s62, 1
        %s523 = smul.addr %s522, 16
        %s524 = scalar_lea.vmem [#allocation4], %s523
        %p525 = pneg %p75
        %p526 = pneg %p72
        %s527 = sand.u32 %s32, 1
        %s528 = scalar_lea.sflag [#allocation8], %s527
        %s529 = sand.u32 %s90, 1
        %s530 = smul.addr %s529, 128
        %s531 = scalar_lea.vmem [#allocation7], %s530
        %p532 = pneg %p103
        %p533 = pneg %p100
        %s534 = sand.u32 %s32, 1
        %s535 = scalar_lea.sflag [#allocation8], %s534
        %s536 = sand.u32 %s126, 1
        %s537 = smul.addr %s536, 16
        %s538 = scalar_lea.vmem [#allocation9], %s537
        %p539 = pneg %p139
        %p540 = pneg %p136
        %p541 = pneg %p160
        %p542 = pneg %p157
        %p543 = pneg %p181
        %p544 = pneg %p178
        %p545 = pneg %p202
        %p546 = pneg %p199
        %p547 = pneg %p223
        %p548 = pneg %p220
        %p549 = pneg %p244
        %p550 = pneg %p241
        %p551 = pneg %p265
        %p552 = pneg %p262
        %p553 = pneg %p286
        %p554 = pneg %p283
        %p555 = pneg %p307
        %p556 = pneg %p304
        %p557 = pneg %p328
        %p558 = pneg %p325
        %p559 = pneg %p356
        %p560 = pneg %p353
        %s561 = sand.u32 %s343, 1
        %s562 = scalar_lea.sflag [#allocation6], %s561
        %s563 = sand.u32 %s343, 1
        %s564 = smul.addr %s563, 128
        %s565 = scalar_lea.vmem [#allocation10], %s564
        %s566 = smul.u32 %s37, 8
        %s567 = ssub.s32 %s566, 1
        %p568 = scmp.gt.s32.totalorder %s567, 0
        %s569 = scalar_select %p568, %s567, 0
        %s570 = smul.u32 8, %s37
        %s571 = sadd.s32 %s37, 1
        %s572 = smul.u32 %s571, 8
        %p573 = scmp.lt.s32.totalorder %s572, 15
        %s574 = scalar_select %p573, %s572, 15
        %s575 = smul.u32 8, %s37
        %v577 = vld [vmem:[%s494] sm:$0xff]
        %v578 = vld [vmem:[%s494 + $0x8] sm:$0xff]
        %v579 = vld [vmem:[%s504] sm:$0xff]
        %v580 = vld [vmem:[%s504 + $0x8] sm:$0xff]
        %v581 = vld [vmem:[%s504 + $0x10] sm:$0xff]
        %v582 = vld [vmem:[%s504 + $0x18] sm:$0xff]
        %v583 = vld [vmem:[%s504 + $0x20] sm:$0xff]
        %v584 = vld [vmem:[%s504 + $0x28] sm:$0xff]
        %v585 = vld [vmem:[%s504 + $0x30] sm:$0xff]
        %v586 = vld [vmem:[%s504 + $0x38] sm:$0xff]
        %v587 = vld [vmem:[%s504 + $0x40] sm:$0xff]
        %v588 = vld [vmem:[%s504 + $0x48] sm:$0xff]
        %v589 = vld [vmem:[%s504 + $0x50] sm:$0xff]
        %v590 = vld [vmem:[%s504 + $0x58] sm:$0xff]
        %v591 = vld [vmem:[%s504 + $0x60] sm:$0xff]
        %v592 = vld [vmem:[%s504 + $0x68] sm:$0xff]
        %v593 = vld [vmem:[%s504 + $0x70] sm:$0xff]
        %v594 = vld [vmem:[%s504 + $0x78] sm:$0xff]
        %v595 = vld [vmem:[%s514] sm:$0xff]
        %v596 = vld [vmem:[%s514 + $0x8] sm:$0xff]
        %v597 = vld [vmem:[%s3] sm:$0x1]
        %v599 = vperm.slane %v597, 0
        %v601 = vmul.f32 %v577, %v599
        %v602 = vmul.f32 %v578, %v599
        %v603 = vmul.f32 %v579, %v599
        %v604 = vmul.f32 %v580, %v599
        %v605 = vmul.f32 %v581, %v599
        %v606 = vmul.f32 %v582, %v599
        %v607 = vmul.f32 %v583, %v599
        %v608 = vmul.f32 %v584, %v599
        %v609 = vmul.f32 %v585, %v599
        %v610 = vmul.f32 %v586, %v599
        %v611 = vmul.f32 %v587, %v599
        %v612 = vmul.f32 %v588, %v599
        %v613 = vmul.f32 %v589, %v599
        %v614 = vmul.f32 %v590, %v599
        %v615 = vmul.f32 %v591, %v599
        %v616 = vmul.f32 %v592, %v599
        %v617 = vmul.f32 %v593, %v599
        %v618 = vmul.f32 %v594, %v599
        %v619 = vmul.f32 %v595, %v599
        %v620 = vmul.f32 %v596, %v599
        %v621 = vld [vmem:[%s4] sm:$0x1]
        %v623 = vperm.slane %v621, 0
        %v625 = vadd.f32 %v601, %v623
        %v626 = vadd.f32 %v602, %v623
        %v627 = vadd.f32 %v603, %v623
        %v628 = vadd.f32 %v604, %v623
        %v629 = vadd.f32 %v605, %v623
        %v630 = vadd.f32 %v606, %v623
        %v631 = vadd.f32 %v607, %v623
        %v632 = vadd.f32 %v608, %v623
        %v633 = vadd.f32 %v609, %v623
        %v634 = vadd.f32 %v610, %v623
        %v635 = vadd.f32 %v611, %v623
        %v636 = vadd.f32 %v612, %v623
        %v637 = vadd.f32 %v613, %v623
        %v638 = vadd.f32 %v614, %v623
        %v639 = vadd.f32 %v615, %v623
        %v640 = vadd.f32 %v616, %v623
        %v641 = vadd.f32 %v617, %v623
        %v642 = vadd.f32 %v618, %v623
        %v643 = vadd.f32 %v619, %v623
        %v644 = vadd.f32 %v620, %v623
        %v645 = vmax.f32 %v625, 0.0
        %v646 = vmax.f32 %v626, 0.0
        %v647 = vmax.f32 %v627, 0.0
        %v648 = vmax.f32 %v628, 0.0
        %v649 = vmax.f32 %v629, 0.0
        %v650 = vmax.f32 %v630, 0.0
        %v651 = vmax.f32 %v631, 0.0
        %v652 = vmax.f32 %v632, 0.0
        %v653 = vmax.f32 %v633, 0.0
        %v654 = vmax.f32 %v634, 0.0
        %v655 = vmax.f32 %v635, 0.0
        %v656 = vmax.f32 %v636, 0.0
        %v657 = vmax.f32 %v637, 0.0
        %v658 = vmax.f32 %v638, 0.0
        %v659 = vmax.f32 %v639, 0.0
        %v660 = vmax.f32 %v640, 0.0
        %v661 = vmax.f32 %v641, 0.0
        %v662 = vmax.f32 %v642, 0.0
        %v663 = vmax.f32 %v643, 0.0
        %v664 = vmax.f32 %v644, 0.0
        %v665 = vpack.c.bf16 %v646, %v645
        %v666 = vpack.c.bf16 %v648, %v647
        %v667 = vpack.c.bf16 %v650, %v649
        %v668 = vpack.c.bf16 %v652, %v651
        %v669 = vpack.c.bf16 %v654, %v653
        %v670 = vpack.c.bf16 %v656, %v655
        %v671 = vpack.c.bf16 %v658, %v657
        %v672 = vpack.c.bf16 %v660, %v659
        %v673 = vpack.c.bf16 %v662, %v661
        %v674 = vpack.c.bf16 %v664, %v663
        %v675 = vld [vmem:[%s5] sm:$0xf]
        %v676 = vld [vmem:[%s5 + $0x4] sm:$0xf]
        %v677 = vld [vmem:[%s5 + $0x8] sm:$0xf]
        %v678 = vld [vmem:[%s5 + $0xc] sm:$0xf]
        %v679 = vld [vmem:[%s5 + $0x10] sm:$0xf]
        %v680 = vld [vmem:[%s5 + $0x14] sm:$0xf]
        %v681 = vld [vmem:[%s5 + $0x18] sm:$0xf]
        %v682 = vld [vmem:[%s5 + $0x1c] sm:$0xf]
        %v683 = vld [vmem:[%s5 + $0x20] sm:$0xf]
        %v684 = vld [vmem:[%s5 + $0x24] sm:$0xf]
        %v685 = vld [vmem:[%s5 + $0x28] sm:$0xf]
        %v686 = vld [vmem:[%s5 + $0x2c] sm:$0xf]
        %v687 = vld [vmem:[%s5 + $0x30] sm:$0xf]
        %v688 = vld [vmem:[%s5 + $0x34] sm:$0xf]
        %v689 = vld [vmem:[%s5 + $0x38] sm:$0xf]
        %v690 = vld [vmem:[%s5 + $0x3c] sm:$0xf]
        %v707 = vunpack.c.l.b16 %v675
        %v708 = vunpack.c.l.b16 %v676
        %v709 = vunpack.c.l.b16 %v677
        %v710 = vunpack.c.l.b16 %v678
        %v711 = vunpack.c.l.b16 %v679
        %v712 = vunpack.c.l.b16 %v680
        %v713 = vunpack.c.l.b16 %v681
        %v714 = vunpack.c.l.b16 %v682
        %v715 = vunpack.c.l.b16 %v683
        %v716 = vunpack.c.l.b16 %v684
        %v717 = vunpack.c.l.b16 %v685
        %v718 = vunpack.c.l.b16 %v686
        %v719 = vunpack.c.l.b16 %v687
        %v720 = vunpack.c.l.b16 %v688
        %v721 = vunpack.c.l.b16 %v689
        %v722 = vunpack.c.l.b16 %v690
        %v723 = vpack.c.b16 %v708, %v707
        %v724 = vpack.c.b16 %v710, %v709
        %v725 = vpack.c.b16 %v712, %v711
        %v726 = vpack.c.b16 %v714, %v713
        %v727 = vpack.c.b16 %v716, %v715
        %v728 = vpack.c.b16 %v718, %v717
        %v729 = vpack.c.b16 %v720, %v719
        %v730 = vpack.c.b16 %v722, %v721
        %739 = vmatpush.bf16.msra.mxu0 %v730
        %740 = vmatpush.bf16.msra.mxu0 %v729
        %741 = vmatpush.bf16.msra.mxu0 %v728
        %742 = vmatpush.bf16.msra.mxu0 %v727
        %743 = vmatpush.bf16.msra.mxu0 %v726
        %744 = vmatpush.bf16.msra.mxu0 %v725
        %745 = vmatpush.bf16.msra.mxu0 %v724
        %746 = vmatpush.bf16.msra.mxu0 %v723
        %747 = vmatmul.bf16.gmra.mxu0 %v665
        %v748 = vpop.f32.mrf.mxu0
        %v749 = vadd.f32 0.0, %v748
        %v750 = vpop.f32.mrf.mxu0
        %v751 = vadd.f32 0.0, %v750
        %752 = vmatmul.bf16.gmra.mxu0 %v666
        %v753 = vpop.f32.mrf.mxu0
        %v754 = vadd.f32 0.0, %v753
        %v755 = vpop.f32.mrf.mxu0
        %v756 = vadd.f32 0.0, %v755
        %757 = vmatmul.bf16.gmra.mxu0 %v667
        %v758 = vpop.f32.mrf.mxu0
        %v759 = vadd.f32 0.0, %v758
        %v760 = vpop.f32.mrf.mxu0
        %v761 = vadd.f32 0.0, %v760
        %762 = vmatmul.bf16.gmra.mxu0 %v668
        %v763 = vpop.f32.mrf.mxu0
        %v764 = vadd.f32 0.0, %v763
        %v765 = vpop.f32.mrf.mxu0
        %v766 = vadd.f32 0.0, %v765
        %767 = vmatmul.bf16.gmra.mxu0 %v669
        %v768 = vpop.f32.mrf.mxu0
        %v769 = vadd.f32 0.0, %v768
        %v770 = vpop.f32.mrf.mxu0
        %v771 = vadd.f32 0.0, %v770
        %772 = vmatmul.bf16.gmra.mxu0 %v670
        %v773 = vpop.f32.mrf.mxu0
        %v774 = vadd.f32 0.0, %v773
        %v775 = vpop.f32.mrf.mxu0
        %v776 = vadd.f32 0.0, %v775
        %777 = vmatmul.bf16.gmra.mxu0 %v671
        %v778 = vpop.f32.mrf.mxu0
        %v779 = vadd.f32 0.0, %v778
        %v780 = vpop.f32.mrf.mxu0
        %v781 = vadd.f32 0.0, %v780
        %782 = vmatmul.bf16.gmra.mxu0 %v672
        %v783 = vpop.f32.mrf.mxu0
        %v784 = vadd.f32 0.0, %v783
        %v785 = vpop.f32.mrf.mxu0
        %v786 = vadd.f32 0.0, %v785
        %787 = vmatmul.bf16.gmra.mxu0 %v673
        %v788 = vpop.f32.mrf.mxu0
        %v789 = vadd.f32 0.0, %v788
        %v790 = vpop.f32.mrf.mxu0
        %v791 = vadd.f32 0.0, %v790
        %792 = vmatmul.bf16.gmra.mxu0 %v674
        %v793 = vpop.f32.mrf.mxu0
        %v794 = vadd.f32 0.0, %v793
        %v795 = vpop.f32.mrf.mxu0
        %v796 = vadd.f32 0.0, %v795
        %797 = vdwg.mxu0
        %v798 = vld [vmem:[%s6] sm:$0x1]
        %v800 = vperm.slane %v798, 0
        %v802 = vmul.f32 %v749, %v800
        %v803 = vmul.f32 %v751, %v800
        %v804 = vmul.f32 %v754, %v800
        %v805 = vmul.f32 %v756, %v800
        %v806 = vmul.f32 %v759, %v800
        %v807 = vmul.f32 %v761, %v800
        %v808 = vmul.f32 %v764, %v800
        %v809 = vmul.f32 %v766, %v800
        %v810 = vmul.f32 %v769, %v800
        %v811 = vmul.f32 %v771, %v800
        %v812 = vmul.f32 %v774, %v800
        %v813 = vmul.f32 %v776, %v800
        %v814 = vmul.f32 %v779, %v800
        %v815 = vmul.f32 %v781, %v800
        %v816 = vmul.f32 %v784, %v800
        %v817 = vmul.f32 %v786, %v800
        %v818 = vmul.f32 %v789, %v800
        %v819 = vmul.f32 %v791, %v800
        %v820 = vmul.f32 %v794, %v800
        %v821 = vmul.f32 %v796, %v800
        %v822 = vld [vmem:[%s7] sm:$0x1]
        %v824 = vperm.slane %v822, 0
        %v826 = vadd.f32 %v802, %v824
        %v827 = vadd.f32 %v803, %v824
        %v828 = vadd.f32 %v804, %v824
        %v829 = vadd.f32 %v805, %v824
        %v830 = vadd.f32 %v806, %v824
        %v831 = vadd.f32 %v807, %v824
        %v832 = vadd.f32 %v808, %v824
        %v833 = vadd.f32 %v809, %v824
        %v834 = vadd.f32 %v810, %v824
        %v835 = vadd.f32 %v811, %v824
        %v836 = vadd.f32 %v812, %v824
        %v837 = vadd.f32 %v813, %v824
        %v838 = vadd.f32 %v814, %v824
        %v839 = vadd.f32 %v815, %v824
        %v840 = vadd.f32 %v816, %v824
        %v841 = vadd.f32 %v817, %v824
        %v842 = vadd.f32 %v818, %v824
        %v843 = vadd.f32 %v819, %v824
        %v844 = vadd.f32 %v820, %v824
        %v845 = vadd.f32 %v821, %v824
        %v846 = vmax.f32 %v826, 0.0
        %v847 = vmax.f32 %v827, 0.0
        %v848 = vmax.f32 %v828, 0.0
        %v849 = vmax.f32 %v829, 0.0
        %v850 = vmax.f32 %v830, 0.0
        %v851 = vmax.f32 %v831, 0.0
        %v852 = vmax.f32 %v832, 0.0
        %v853 = vmax.f32 %v833, 0.0
        %v854 = vmax.f32 %v834, 0.0
        %v855 = vmax.f32 %v835, 0.0
        %v856 = vmax.f32 %v836, 0.0
        %v857 = vmax.f32 %v837, 0.0
        %v858 = vmax.f32 %v838, 0.0
        %v859 = vmax.f32 %v839, 0.0
        %v860 = vmax.f32 %v840, 0.0
        %v861 = vmax.f32 %v841, 0.0
        %v862 = vmax.f32 %v842, 0.0
        %v863 = vmax.f32 %v843, 0.0
        %v864 = vmax.f32 %v844, 0.0
        %v865 = vmax.f32 %v845, 0.0
        %p866 = scmp.eq.s32.totalorder %s37, 0
        %s867 = scalar_select %p866, 1, 0
        %v868 = vstv %s867
        %vm869 = vcmp.eq.s32.totalorder %v868, 1
        %p870 = scmp.eq.s32.totalorder %s37, 1
        %s871 = scalar_select %p870, 1, 0
        %v872 = vstv %s871
        %vm873 = vcmp.eq.s32.totalorder %v872, 1
        %v874 = vsel %vm869, 1, 0
        %v875 = vsel %vm873, 1, 0
        %vm876 = vcmp.eq.s32.totalorder %v874, 1
        %vm877 = vcmp.eq.s32.totalorder %v875, 1
        %v878 = vsel %vm876, 0.0, %v846
        %v879 = vsel %vm876, 0.0, %v847
        %v880 = vsel 0, 0.0, %v848
        %v881 = vsel 0, 0.0, %v849
        %v882 = vsel 0, 0.0, %v850
        %v883 = vsel 0, 0.0, %v851
        %v884 = vsel 0, 0.0, %v852
        %v885 = vsel 0, 0.0, %v853
        %v886 = vsel 0, 0.0, %v854
        %v887 = vsel 0, 0.0, %v855
        %v888 = vsel 0, 0.0, %v856
        %v889 = vsel 0, 0.0, %v857
        %v890 = vsel 0, 0.0, %v858
        %v891 = vsel 0, 0.0, %v859
        %v892 = vsel 0, 0.0, %v860
        %v893 = vsel 0, 0.0, %v861
        %v894 = vsel 0, 0.0, %v862
        %v895 = vsel 0, 0.0, %v863
        %v896 = vsel %vm877, 0.0, %v864
        %v897 = vsel %vm877, 0.0, %v865
        %vm898 = vcmask 253952
        %vm899 = vsmask.f32 256
        %vm900 = vmand %vm898, %vm899
        %v901 = vld [vmem:[#allocation2] sm:$0x1]
        %v902 = vsel %vm900, 0, %v901
        %903 = vst [vmem:[#allocation2] sm:$0x1] %v902
        %v904 = vld [vmem:[#allocation2 + $0xc] sm:$0x1]
        %v905 = vsel %vm900, 0, %v904
        %906 = vst [vmem:[#allocation2 + $0xc] sm:$0x1] %v905
        %v907 = vld [vmem:[#allocation2 + $0x18] sm:$0x1]
        %v908 = vsel %vm900, 0, %v907
        %909 = vst [vmem:[#allocation2 + $0x18] sm:$0x1] %v908
        %v910 = vld [vmem:[#allocation2 + $0x24] sm:$0x1]
        %v911 = vsel %vm900, 0, %v910
        %912 = vst [vmem:[#allocation2 + $0x24] sm:$0x1] %v911
        %v913 = vld [vmem:[#allocation2 + $0x30] sm:$0x1]
        %v914 = vsel %vm900, 0, %v913
        %915 = vst [vmem:[#allocation2 + $0x30] sm:$0x1] %v914
        %v916 = vld [vmem:[#allocation2 + $0x3c] sm:$0x1]
        %v917 = vsel %vm900, 0, %v916
        %918 = vst [vmem:[#allocation2 + $0x3c] sm:$0x1] %v917
        %v919 = vld [vmem:[#allocation2 + $0x48] sm:$0x1]
        %v920 = vsel %vm900, 0, %v919
        %921 = vst [vmem:[#allocation2 + $0x48] sm:$0x1] %v920
        %v922 = vld [vmem:[#allocation2 + $0x54] sm:$0x1]
        %v923 = vsel %vm900, 0, %v922
        %924 = vst [vmem:[#allocation2 + $0x54] sm:$0x1] %v923
        %v925 = vld [vmem:[#allocation2 + $0x60] sm:$0x1]
        %v926 = vsel %vm900, 0, %v925
        %927 = vst [vmem:[#allocation2 + $0x60] sm:$0x1] %v926
        %v928 = vld [vmem:[#allocation2 + $0x6c] sm:$0x1]
        %v929 = vsel %vm900, 0, %v928
        %930 = vst [vmem:[#allocation2 + $0x6c] sm:$0x1] %v929
        %vm931 = vsmask.f32 7938
        %vm932 = vmand %vm898, %vm931
        %v933 = vld [vmem:[#allocation2 + $0x8] sm:$0x1]
        %v934 = vsel %vm932, 0, %v933
        %935 = vst [vmem:[#allocation2 + $0x8] sm:$0x1] %v934
        %v936 = vld [vmem:[#allocation2 + $0x14] sm:$0x1]
        %v937 = vsel %vm932, 0, %v936
        %938 = vst [vmem:[#allocation2 + $0x14] sm:$0x1] %v937
        %v939 = vld [vmem:[#allocation2 + $0x20] sm:$0x1]
        %v940 = vsel %vm932, 0, %v939
        %941 = vst [vmem:[#allocation2 + $0x20] sm:$0x1] %v940
        %v942 = vld [vmem:[#allocation2 + $0x2c] sm:$0x1]
        %v943 = vsel %vm932, 0, %v942
        %944 = vst [vmem:[#allocation2 + $0x2c] sm:$0x1] %v943
        %v945 = vld [vmem:[#allocation2 + $0x38] sm:$0x1]
        %v946 = vsel %vm932, 0, %v945
        %947 = vst [vmem:[#allocation2 + $0x38] sm:$0x1] %v946
        %v948 = vld [vmem:[#allocation2 + $0x44] sm:$0x1]
        %v949 = vsel %vm932, 0, %v948
        %950 = vst [vmem:[#allocation2 + $0x44] sm:$0x1] %v949
        %v951 = vld [vmem:[#allocation2 + $0x50] sm:$0x1]
        %v952 = vsel %vm932, 0, %v951
        %953 = vst [vmem:[#allocation2 + $0x50] sm:$0x1] %v952
        %v954 = vld [vmem:[#allocation2 + $0x5c] sm:$0x1]
        %v955 = vsel %vm932, 0, %v954
        %956 = vst [vmem:[#allocation2 + $0x5c] sm:$0x1] %v955
        %v957 = vld [vmem:[#allocation2 + $0x68] sm:$0x1]
        %v958 = vsel %vm932, 0, %v957
        %959 = vst [vmem:[#allocation2 + $0x68] sm:$0x1] %v958
        %v960 = vld [vmem:[#allocation2 + $0x74] sm:$0x1]
        %v961 = vsel %vm932, 0, %v960
        %962 = vst [vmem:[#allocation2 + $0x74] sm:$0x1] %v961
        %v963 = vpack.c.bf16 %v878, %v878
        %v964 = vpack.c.bf16 %v879, %v879
        %v965 = vpack.c.bf16 %v880, %v880
        %v966 = vpack.c.bf16 %v881, %v881
        %v967 = vpack.c.bf16 %v882, %v882
        %v968 = vpack.c.bf16 %v883, %v883
        %v969 = vpack.c.bf16 %v884, %v884
        %v970 = vpack.c.bf16 %v885, %v885
        %v971 = vpack.c.bf16 %v886, %v886
        %v972 = vpack.c.bf16 %v887, %v887
        %v973 = vpack.c.bf16 %v888, %v888
        %v974 = vpack.c.bf16 %v889, %v889
        %v975 = vpack.c.bf16 %v890, %v890
        %v976 = vpack.c.bf16 %v891, %v891
        %v977 = vpack.c.bf16 %v892, %v892
        %v978 = vpack.c.bf16 %v893, %v893
        %v979 = vpack.c.bf16 %v894, %v894
        %v980 = vpack.c.bf16 %v895, %v895
        %v981 = vpack.c.bf16 %v896, %v896
        %v982 = vpack.c.bf16 %v897, %v897
        %vm983 = vsmask.f32 4368
        %vm984 = vmor %vm899, %vm983
        %v986 = vshrl.u32 %v963, 16
        %v988 = vrot.slane %v986, 7
        %v989 = vshll.u32 %v963, 16
        %v991 = vor.u32 %v988, %v989
        %v992 = vrot.slane %v988, 4
        %v994 = vshrl.u32 %v964, 16
        %v996 = vrot.slane %v994, 7
        %v997 = vshll.u32 %v964, 16
        %v999 = vor.u32 %v996, %v997
        %v1000 = vsel %vm984, %v992, %v999
        %v1001 = vrot.slane %v996, 4
        %v1003 = vshrl.u32 %v965, 16
        %v1005 = vrot.slane %v1003, 7
        %v1006 = vshll.u32 %v965, 16
        %v1008 = vor.u32 %v1005, %v1006
        %v1009 = vrot.slane %v1005, 4
        %v1011 = vshrl.u32 %v966, 16
        %v1013 = vrot.slane %v1011, 7
        %v1014 = vshll.u32 %v966, 16
        %v1016 = vor.u32 %v1013, %v1014
        %v1017 = vsel %vm984, %v1009, %v1016
        %v1018 = vrot.slane %v1013, 4
        %v1020 = vshrl.u32 %v967, 16
        %v1022 = vrot.slane %v1020, 7
        %v1023 = vshll.u32 %v967, 16
        %v1025 = vor.u32 %v1022, %v1023
        %v1026 = vrot.slane %v1022, 4
        %v1028 = vshrl.u32 %v968, 16
        %v1030 = vrot.slane %v1028, 7
        %v1031 = vshll.u32 %v968, 16
        %v1033 = vor.u32 %v1030, %v1031
        %v1034 = vsel %vm984, %v1026, %v1033
        %v1035 = vrot.slane %v1030, 4
        %v1037 = vshrl.u32 %v969, 16
        %v1039 = vrot.slane %v1037, 7
        %v1040 = vshll.u32 %v969, 16
        %v1042 = vor.u32 %v1039, %v1040
        %v1043 = vrot.slane %v1039, 4
        %v1045 = vshrl.u32 %v970, 16
        %v1047 = vrot.slane %v1045, 7
        %v1048 = vshll.u32 %v970, 16
        %v1050 = vor.u32 %v1047, %v1048
        %v1051 = vsel %vm984, %v1043, %v1050
        %v1052 = vrot.slane %v1047, 4
        %v1054 = vshrl.u32 %v971, 16
        %v1056 = vrot.slane %v1054, 7
        %v1057 = vshll.u32 %v971, 16
        %v1059 = vor.u32 %v1056, %v1057
        %v1060 = vrot.slane %v1056, 4
        %v1062 = vshrl.u32 %v972, 16
        %v1064 = vrot.slane %v1062, 7
        %v1065 = vshll.u32 %v972, 16
        %v1067 = vor.u32 %v1064, %v1065
        %v1068 = vsel %vm984, %v1060, %v1067
        %v1069 = vrot.slane %v1064, 4
        %v1071 = vshrl.u32 %v973, 16
        %v1073 = vrot.slane %v1071, 7
        %v1074 = vshll.u32 %v973, 16
        %v1076 = vor.u32 %v1073, %v1074
        %v1077 = vrot.slane %v1073, 4
        %v1079 = vshrl.u32 %v974, 16
        %v1081 = vrot.slane %v1079, 7
        %v1082 = vshll.u32 %v974, 16
        %v1084 = vor.u32 %v1081, %v1082
        %v1085 = vsel %vm984, %v1077, %v1084
        %v1086 = vrot.slane %v1081, 4
        %v1088 = vshrl.u32 %v975, 16
        %v1090 = vrot.slane %v1088, 7
        %v1091 = vshll.u32 %v975, 16
        %v1093 = vor.u32 %v1090, %v1091
        %v1094 = vrot.slane %v1090, 4
        %v1096 = vshrl.u32 %v976, 16
        %v1098 = vrot.slane %v1096, 7
        %v1099 = vshll.u32 %v976, 16
        %v1101 = vor.u32 %v1098, %v1099
        %v1102 = vsel %vm984, %v1094, %v1101
        %v1103 = vrot.slane %v1098, 4
        %v1105 = vshrl.u32 %v977, 16
        %v1107 = vrot.slane %v1105, 7
        %v1108 = vshll.u32 %v977, 16
        %v1110 = vor.u32 %v1107, %v1108
        %v1111 = vrot.slane %v1107, 4
        %v1113 = vshrl.u32 %v978, 16
        %v1115 = vrot.slane %v1113, 7
        %v1116 = vshll.u32 %v978, 16
        %v1118 = vor.u32 %v1115, %v1116
        %v1119 = vsel %vm984, %v1111, %v1118
        %v1120 = vrot.slane %v1115, 4
        %v1122 = vshrl.u32 %v979, 16
        %v1124 = vrot.slane %v1122, 7
        %v1125 = vshll.u32 %v979, 16
        %v1127 = vor.u32 %v1124, %v1125
        %v1128 = vrot.slane %v1124, 4
        %v1130 = vshrl.u32 %v980, 16
        %v1132 = vrot.slane %v1130, 7
        %v1133 = vshll.u32 %v980, 16
        %v1135 = vor.u32 %v1132, %v1133
        %v1136 = vsel %vm984, %v1128, %v1135
        %v1137 = vrot.slane %v1132, 4
        %v1139 = vshrl.u32 %v981, 16
        %v1141 = vrot.slane %v1139, 7
        %v1142 = vshll.u32 %v981, 16
        %v1144 = vor.u32 %v1141, %v1142
        %v1145 = vrot.slane %v1141, 4
        %v1147 = vshrl.u32 %v982, 16
        %v1149 = vrot.slane %v1147, 7
        %v1150 = vshll.u32 %v982, 16
        %v1152 = vor.u32 %v1149, %v1150
        %v1153 = vsel %vm984, %v1145, %v1152
        %v1154 = vrot.slane %v1149, 4
        %vm1185 = vcmask 257024
        %vm1186 = vmand %vm1185, %vm931
        %v1187 = vld [vmem:[#allocation2] sm:$0xf]
        %v1188 = vsel %vm1186, %v991, %v1187
        %1189 = vst [vmem:[#allocation2] sm:$0xf] %v1188
        %vm1190 = vcmask 257024
        %1191 = vst.msk [vmem:[#allocation2 + $0x4] sm:$0xf] %vm1190, %v1000
        %v1192 = vld [vmem:[#allocation2 + $0x8] sm:$0x1]
        %v1193 = vsel %vm900, %v1001, %v1192
        %1194 = vst [vmem:[#allocation2 + $0x8] sm:$0x1] %v1193
        %v1195 = vld [vmem:[#allocation2 + $0xc] sm:$0xf]
        %v1196 = vsel %vm1186, %v1008, %v1195
        %1197 = vst [vmem:[#allocation2 + $0xc] sm:$0xf] %v1196
        %1198 = vst.msk [vmem:[#allocation2 + $0x10] sm:$0xf] %vm1190, %v1017
        %v1199 = vld [vmem:[#allocation2 + $0x14] sm:$0x1]
        %v1200 = vsel %vm900, %v1018, %v1199
        %1201 = vst [vmem:[#allocation2 + $0x14] sm:$0x1] %v1200
        %v1202 = vld [vmem:[#allocation2 + $0x18] sm:$0xf]
        %v1203 = vsel %vm1186, %v1025, %v1202
        %1204 = vst [vmem:[#allocation2 + $0x18] sm:$0xf] %v1203
        %1205 = vst.msk [vmem:[#allocation2 + $0x1c] sm:$0xf] %vm1190, %v1034
        %v1206 = vld [vmem:[#allocation2 + $0x20] sm:$0x1]
        %v1207 = vsel %vm900, %v1035, %v1206
        %1208 = vst [vmem:[#allocation2 + $0x20] sm:$0x1] %v1207
        %v1209 = vld [vmem:[#allocation2 + $0x24] sm:$0xf]
        %v1210 = vsel %vm1186, %v1042, %v1209
        %1211 = vst [vmem:[#allocation2 + $0x24] sm:$0xf] %v1210
        %1212 = vst.msk [vmem:[#allocation2 + $0x28] sm:$0xf] %vm1190, %v1051
        %v1213 = vld [vmem:[#allocation2 + $0x2c] sm:$0x1]
        %v1214 = vsel %vm900, %v1052, %v1213
        %1215 = vst [vmem:[#allocation2 + $0x2c] sm:$0x1] %v1214
        %v1216 = vld [vmem:[#allocation2 + $0x30] sm:$0xf]
        %v1217 = vsel %vm1186, %v1059, %v1216
        %1218 = vst [vmem:[#allocation2 + $0x30] sm:$0xf] %v1217
        %1219 = vst.msk [vmem:[#allocation2 + $0x34] sm:$0xf] %vm1190, %v1068
        %v1220 = vld [vmem:[#allocation2 + $0x38] sm:$0x1]
        %v1221 = vsel %vm900, %v1069, %v1220
        %1222 = vst [vmem:[#allocation2 + $0x38] sm:$0x1] %v1221
        %v1223 = vld [vmem:[#allocation2 + $0x3c] sm:$0xf]
        %v1224 = vsel %vm1186, %v1076, %v1223
        %1225 = vst [vmem:[#allocation2 + $0x3c] sm:$0xf] %v1224
        %1226 = vst.msk [vmem:[#allocation2 + $0x40] sm:$0xf] %vm1190, %v1085
        %v1227 = vld [vmem:[#allocation2 + $0x44] sm:$0x1]
        %v1228 = vsel %vm900, %v1086, %v1227
        %1229 = vst [vmem:[#allocation2 + $0x44] sm:$0x1] %v1228
        %v1230 = vld [vmem:[#allocation2 + $0x48] sm:$0xf]
        %v1231 = vsel %vm1186, %v1093, %v1230
        %1232 = vst [vmem:[#allocation2 + $0x48] sm:$0xf] %v1231
        %1233 = vst.msk [vmem:[#allocation2 + $0x4c] sm:$0xf] %vm1190, %v1102
        %v1234 = vld [vmem:[#allocation2 + $0x50] sm:$0x1]
        %v1235 = vsel %vm900, %v1103, %v1234
        %1236 = vst [vmem:[#allocation2 + $0x50] sm:$0x1] %v1235
        %v1237 = vld [vmem:[#allocation2 + $0x54] sm:$0xf]
        %v1238 = vsel %vm1186, %v1110, %v1237
        %1239 = vst [vmem:[#allocation2 + $0x54] sm:$0xf] %v1238
        %1240 = vst.msk [vmem:[#allocation2 + $0x58] sm:$0xf] %vm1190, %v1119
        %v1241 = vld [vmem:[#allocation2 + $0x5c] sm:$0x1]
        %v1242 = vsel %vm900, %v1120, %v1241
        %1243 = vst [vmem:[#allocation2 + $0x5c] sm:$0x1] %v1242
        %v1244 = vld [vmem:[#allocation2 + $0x60] sm:$0xf]
        %v1245 = vsel %vm1186, %v1127, %v1244
        %1246 = vst [vmem:[#allocation2 + $0x60] sm:$0xf] %v1245
        %1247 = vst.msk [vmem:[#allocation2 + $0x64] sm:$0xf] %vm1190, %v1136
        %v1248 = vld [vmem:[#allocation2 + $0x68] sm:$0x1]
        %v1249 = vsel %vm900, %v1137, %v1248
        %1250 = vst [vmem:[#allocation2 + $0x68] sm:$0x1] %v1249
        %v1251 = vld [vmem:[#allocation2 + $0x6c] sm:$0xf]
        %v1252 = vsel %vm1186, %v1144, %v1251
        %1253 = vst [vmem:[#allocation2 + $0x6c] sm:$0xf] %v1252
        %1254 = vst.msk [vmem:[#allocation2 + $0x70] sm:$0xf] %vm1190, %v1153
        %v1255 = vld [vmem:[#allocation2 + $0x74] sm:$0x1]
        %v1256 = vsel %vm900, %v1154, %v1255
        %1257 = vst [vmem:[#allocation2 + $0x74] sm:$0x1] %v1256
        %v1258 = vld [vmem:[#allocation2] sm:$0xf]
        %v1259 = vld [vmem:[#allocation2 + $0x4] sm:$0xf]
        %v1260 = vld [vmem:[#allocation2 + $0x8] sm:$0x1]
        %v1261 = vld [vmem:[#allocation2 + $0xc] sm:$0xf]
        %v1262 = vld [vmem:[#allocation2 + $0x10] sm:$0xf]
        %v1263 = vld [vmem:[#allocation2 + $0x14] sm:$0x1]
        %v1264 = vld [vmem:[#allocation2 + $0x18] sm:$0xf]
        %v1265 = vld [vmem:[#allocation2 + $0x1c] sm:$0xf]
        %v1266 = vld [vmem:[#allocation2 + $0x20] sm:$0x1]
        %v1267 = vld [vmem:[#allocation2 + $0x24] sm:$0xf]
        %v1268 = vld [vmem:[#allocation2 + $0x28] sm:$0xf]
        %v1269 = vld [vmem:[#allocation2 + $0x2c] sm:$0x1]
        %v1270 = vld [vmem:[#allocation2 + $0x30] sm:$0xf]
        %v1271 = vld [vmem:[#allocation2 + $0x34] sm:$0xf]
        %v1272 = vld [vmem:[#allocation2 + $0x38] sm:$0x1]
        %v1273 = vld [vmem:[#allocation2 + $0x3c] sm:$0xf]
        %v1274 = vld [vmem:[#allocation2 + $0x40] sm:$0xf]
        %v1275 = vld [vmem:[#allocation2 + $0x44] sm:$0x1]
        %v1276 = vld [vmem:[#allocation2 + $0x48] sm:$0xf]
        %v1277 = vld [vmem:[#allocation2 + $0x4c] sm:$0xf]
        %v1278 = vld [vmem:[#allocation2 + $0x50] sm:$0x1]
        %v1279 = vld [vmem:[#allocation2 + $0x54] sm:$0xf]
        %v1280 = vld [vmem:[#allocation2 + $0x58] sm:$0xf]
        %v1281 = vld [vmem:[#allocation2 + $0x5c] sm:$0x1]
        %v1298 = vunpack.c.l.b16 %v1258
        %v1299 = vunpack.c.l.b16 %v1259
        %v1300 = vunpack.c.l.b16 %v1261
        %v1301 = vunpack.c.l.b16 %v1262
        %v1302 = vunpack.c.l.b16 %v1264
        %v1303 = vunpack.c.l.b16 %v1265
        %v1304 = vunpack.c.l.b16 %v1267
        %v1305 = vunpack.c.l.b16 %v1268
        %v1306 = vunpack.c.l.b16 %v1270
        %v1307 = vunpack.c.l.b16 %v1271
        %v1308 = vunpack.c.l.b16 %v1273
        %v1309 = vunpack.c.l.b16 %v1274
        %v1310 = vunpack.c.l.b16 %v1276
        %v1311 = vunpack.c.l.b16 %v1277
        %v1312 = vunpack.c.l.b16 %v1279
        %v1313 = vunpack.c.l.b16 %v1280
        %v1314 = vpack.c.b16 %v1299, %v1298
        %v1315 = vpack.c.b16 %v1301, %v1300
        %v1316 = vpack.c.b16 %v1303, %v1302
        %v1317 = vpack.c.b16 %v1305, %v1304
        %v1318 = vpack.c.b16 %v1307, %v1306
        %v1319 = vpack.c.b16 %v1309, %v1308
        %v1320 = vpack.c.b16 %v1311, %v1310
        %v1321 = vpack.c.b16 %v1313, %v1312
        %v1330 = vunpack.c.l.b16 %v1260
        %v1331 = vunpack.c.l.b16 %v1263
        %v1332 = vunpack.c.l.b16 %v1266
        %v1333 = vunpack.c.l.b16 %v1269
        %v1334 = vunpack.c.l.b16 %v1272
        %v1335 = vunpack.c.l.b16 %v1275
        %v1336 = vunpack.c.l.b16 %v1278
        %v1337 = vunpack.c.l.b16 %v1281
        %v1338 = vpack.c.b16 %v1330, %v1330
        %v1339 = vpack.c.b16 %v1331, %v1331
        %v1340 = vpack.c.b16 %v1332, %v1332
        %v1341 = vpack.c.b16 %v1333, %v1333
        %v1342 = vpack.c.b16 %v1334, %v1334
        %v1343 = vpack.c.b16 %v1335, %v1335
        %v1344 = vpack.c.b16 %v1336, %v1336
        %v1345 = vpack.c.b16 %v1337, %v1337
        %vm1346 = vsmask.f32 7424
        %v1348 = vshrl.u32 %v1314, 16
        %v1350 = vshll.u32 %v1314, 16
        %v1352 = vrot.slane %v1350, 1
        %v1353 = vor.u32 %v1348, %v1352
        %v1355 = vshll.u32 %v1338, 16
        %v1357 = vrot.slane %v1355, 1
        %v1358 = vsel %vm1346, %v1353, %v1357
        %v1360 = vshrl.u32 %v1315, 16
        %v1362 = vshll.u32 %v1315, 16
        %v1364 = vrot.slane %v1362, 1
        %v1365 = vor.u32 %v1360, %v1364
        %v1367 = vshll.u32 %v1339, 16
        %v1369 = vrot.slane %v1367, 1
        %v1370 = vsel %vm1346, %v1365, %v1369
        %v1372 = vshrl.u32 %v1316, 16
        %v1374 = vshll.u32 %v1316, 16
        %v1376 = vrot.slane %v1374, 1
        %v1377 = vor.u32 %v1372, %v1376
        %v1379 = vshll.u32 %v1340, 16
        %v1381 = vrot.slane %v1379, 1
        %v1382 = vsel %vm1346, %v1377, %v1381
        %v1384 = vshrl.u32 %v1317, 16
        %v1386 = vshll.u32 %v1317, 16
        %v1388 = vrot.slane %v1386, 1
        %v1389 = vor.u32 %v1384, %v1388
        %v1391 = vshll.u32 %v1341, 16
        %v1393 = vrot.slane %v1391, 1
        %v1394 = vsel %vm1346, %v1389, %v1393
        %v1396 = vshrl.u32 %v1318, 16
        %v1398 = vshll.u32 %v1318, 16
        %v1400 = vrot.slane %v1398, 1
        %v1401 = vor.u32 %v1396, %v1400
        %v1403 = vshll.u32 %v1342, 16
        %v1405 = vrot.slane %v1403, 1
        %v1406 = vsel %vm1346, %v1401, %v1405
        %v1408 = vshrl.u32 %v1319, 16
        %v1410 = vshll.u32 %v1319, 16
        %v1412 = vrot.slane %v1410, 1
        %v1413 = vor.u32 %v1408, %v1412
        %v1415 = vshll.u32 %v1343, 16
        %v1417 = vrot.slane %v1415, 1
        %v1418 = vsel %vm1346, %v1413, %v1417
        %v1420 = vshrl.u32 %v1320, 16
        %v1422 = vshll.u32 %v1320, 16
        %v1424 = vrot.slane %v1422, 1
        %v1425 = vor.u32 %v1420, %v1424
        %v1427 = vshll.u32 %v1344, 16
        %v1429 = vrot.slane %v1427, 1
        %v1430 = vsel %vm1346, %v1425, %v1429
        %v1432 = vshrl.u32 %v1321, 16
        %v1434 = vshll.u32 %v1321, 16
        %v1436 = vrot.slane %v1434, 1
        %v1437 = vor.u32 %v1432, %v1436
        %v1439 = vshll.u32 %v1345, 16
        %v1441 = vrot.slane %v1439, 1
        %v1442 = vsel %vm1346, %v1437, %v1441
        %1443 = vrot.lane.b32.xlu0 %v1358, 32
        %v1444 = vpop.permute.xlu0 %1443
        %1445 = vrot.lane.b32.xlu0 %v1370, 32
        %v1446 = vpop.permute.xlu0 %1445
        %1447 = vrot.lane.b32.xlu0 %v1382, 32
        %v1448 = vpop.permute.xlu0 %1447
        %1449 = vrot.lane.b32.xlu0 %v1394, 32
        %v1450 = vpop.permute.xlu0 %1449
        %1451 = vrot.lane.b32.xlu0 %v1406, 32
        %v1452 = vpop.permute.xlu0 %1451
        %1453 = vrot.lane.b32.xlu0 %v1418, 32
        %v1454 = vpop.permute.xlu0 %1453
        %1455 = vrot.lane.b32.xlu0 %v1430, 32
        %v1456 = vpop.permute.xlu0 %1455
        %1457 = vrot.lane.b32.xlu0 %v1442, 32
        %v1458 = vpop.permute.xlu0 %1457
        %vm1459 = vcmask 1046528
        %v1460 = vrot.slane %v1314, 1
        %v1461 = vrot.slane %v1338, 1
        %v1462 = vsel %vm1459, %v1460, %v1461
        %v1463 = vrot.slane %v1315, 1
        %v1464 = vrot.slane %v1339, 1
        %v1465 = vsel %vm1459, %v1463, %v1464
        %v1466 = vrot.slane %v1316, 1
        %v1467 = vrot.slane %v1340, 1
        %v1468 = vsel %vm1459, %v1466, %v1467
        %v1469 = vrot.slane %v1317, 1
        %v1470 = vrot.slane %v1341, 1
        %v1471 = vsel %vm1459, %v1469, %v1470
        %v1472 = vrot.slane %v1318, 1
        %v1473 = vrot.slane %v1342, 1
        %v1474 = vsel %vm1459, %v1472, %v1473
        %v1475 = vrot.slane %v1319, 1
        %v1476 = vrot.slane %v1343, 1
        %v1477 = vsel %vm1459, %v1475, %v1476
        %v1478 = vrot.slane %v1320, 1
        %v1479 = vrot.slane %v1344, 1
        %v1480 = vsel %vm1459, %v1478, %v1479
        %v1481 = vrot.slane %v1321, 1
        %v1482 = vrot.slane %v1345, 1
        %v1483 = vsel %vm1459, %v1481, %v1482
        %1484 = vrot.lane.b32.xlu0 %v1462, 64
        %v1485 = vpop.permute.xlu0 %1484
        %1486 = vrot.lane.b32.xlu0 %v1465, 64
        %v1487 = vpop.permute.xlu0 %1486
        %1488 = vrot.lane.b32.xlu0 %v1468, 64
        %v1489 = vpop.permute.xlu0 %1488
        %1490 = vrot.lane.b32.xlu0 %v1471, 64
        %v1491 = vpop.permute.xlu0 %1490
        %1492 = vrot.lane.b32.xlu0 %v1474, 64
        %v1493 = vpop.permute.xlu0 %1492
        %1494 = vrot.lane.b32.xlu0 %v1477, 64
        %v1495 = vpop.permute.xlu0 %1494
        %1496 = vrot.lane.b32.xlu0 %v1480, 64
        %v1497 = vpop.permute.xlu0 %1496
        %1498 = vrot.lane.b32.xlu0 %v1483, 64
        %v1499 = vpop.permute.xlu0 %1498
        %vm1500 = vcmask 261120
        %v1502 = vsel %vm1500, %v1314, %v1444
        %v1504 = vsel %vm1500, %v1315, %v1446
        %v1506 = vsel %vm1500, %v1316, %v1448
        %v1508 = vsel %vm1500, %v1317, %v1450
        %v1510 = vsel %vm1500, %v1318, %v1452
        %v1512 = vsel %vm1500, %v1319, %v1454
        %v1514 = vsel %vm1500, %v1320, %v1456
        %v1516 = vsel %vm1500, %v1321, %v1458
        %vm1517 = vcmask 523264
        %v1519 = vsel %vm1517, %v1502, %v1485
        %v1521 = vsel %vm1517, %v1504, %v1487
        %v1523 = vsel %vm1517, %v1506, %v1489
        %v1525 = vsel %vm1517, %v1508, %v1491
        %v1527 = vsel %vm1517, %v1510, %v1493
        %v1529 = vsel %vm1517, %v1512, %v1495
        %v1531 = vsel %vm1517, %v1514, %v1497
        %v1533 = vsel %vm1517, %v1516, %v1499
        %v1534 = vld [vmem:[%s8] sm:$0xf]
        %v1535 = vld [vmem:[%s8 + $0x4] sm:$0xf]
        %v1536 = vld [vmem:[%s8 + $0x8] sm:$0xf]
        %v1537 = vld [vmem:[%s8 + $0xc] sm:$0xf]
        %v1538 = vld [vmem:[%s8 + $0x10] sm:$0xf]
        %v1539 = vld [vmem:[%s8 + $0x14] sm:$0xf]
        %v1540 = vld [vmem:[%s8 + $0x18] sm:$0xf]
        %v1541 = vld [vmem:[%s8 + $0x1c] sm:$0xf]
        %v1542 = vld [vmem:[%s8 + $0x20] sm:$0xf]
        %v1543 = vld [vmem:[%s8 + $0x24] sm:$0xf]
        %v1544 = vld [vmem:[%s8 + $0x28] sm:$0xf]
        %v1545 = vld [vmem:[%s8 + $0x2c] sm:$0xf]
        %v1558 = vunpack.c.l.b16 %v1534
        %v1559 = vunpack.c.l.b16 %v1535
        %v1560 = vunpack.c.l.b16 %v1536
        %v1561 = vunpack.c.l.b16 %v1537
        %v1562 = vunpack.c.l.b16 %v1538
        %v1563 = vunpack.c.l.b16 %v1539
        %v1564 = vunpack.c.l.b16 %v1540
        %v1565 = vunpack.c.l.b16 %v1541
        %v1566 = vunpack.c.l.b16 %v1542
        %v1567 = vunpack.c.l.b16 %v1543
        %v1568 = vunpack.c.l.b16 %v1544
        %v1569 = vunpack.c.l.b16 %v1545
        %v1570 = vpack.c.b16 %v1559, %v1558
        %v1571 = vpack.c.b16 %v1561, %v1560
        %v1572 = vpack.c.b16 %v1563, %v1562
        %v1573 = vpack.c.b16 %v1565, %v1564
        %v1574 = vpack.c.b16 %v1567, %v1566
        %v1575 = vpack.c.b16 %v1569, %v1568
        %vm1582 = vcmask 785408
        %v1583 = vsel %vm1582, %v1519, 0
        %v1585 = vsel %vm1582, %v1521, 0
        %v1587 = vsel %vm1582, %v1523, 0
        %v1589 = vsel %vm1582, %v1525, 0
        %v1591 = vsel %vm1582, %v1527, 0
        %v1593 = vsel %vm1582, %v1529, 0
        %v1595 = vsel %vm1582, %v1531, 0
        %v1597 = vsel %vm1582, %v1533, 0
        %1599 = vmatpush.bf16.msra.mxu0 0
        %1600 = vmatpush.bf16.msra.mxu0 0
        %1601 = vmatpush.bf16.msra.mxu0 %v1575
        %1602 = vmatpush.bf16.msra.mxu0 %v1574
        %1603 = vmatpush.bf16.msra.mxu0 %v1573
        %1604 = vmatpush.bf16.msra.mxu0 %v1572
        %1605 = vmatpush.bf16.msra.mxu0 %v1571
        %1606 = vmatpush.bf16.msra.mxu0 %v1570
        %1607 = vmatmul.bf16.gmra.mxu0 %v1583
        %v1608 = vpop.f32.mrf.mxu0
        %v1609 = vadd.f32 0.0, %v1608
        %v1610 = vpop.f32.mrf.mxu0
        %v1611 = vadd.f32 0.0, %v1610
        %1612 = vmatmul.bf16.gmra.mxu0 %v1585
        %v1613 = vpop.f32.mrf.mxu0
        %v1614 = vadd.f32 0.0, %v1613
        %v1615 = vpop.f32.mrf.mxu0
        %v1616 = vadd.f32 0.0, %v1615
        %1617 = vmatmul.bf16.gmra.mxu0 %v1587
        %v1618 = vpop.f32.mrf.mxu0
        %v1619 = vadd.f32 0.0, %v1618
        %v1620 = vpop.f32.mrf.mxu0
        %v1621 = vadd.f32 0.0, %v1620
        %1622 = vmatmul.bf16.gmra.mxu0 %v1589
        %v1623 = vpop.f32.mrf.mxu0
        %v1624 = vadd.f32 0.0, %v1623
        %v1625 = vpop.f32.mrf.mxu0
        %v1626 = vadd.f32 0.0, %v1625
        %1627 = vmatmul.bf16.gmra.mxu0 %v1591
        %v1628 = vpop.f32.mrf.mxu0
        %v1629 = vadd.f32 0.0, %v1628
        %v1630 = vpop.f32.mrf.mxu0
        %v1631 = vadd.f32 0.0, %v1630
        %1632 = vmatmul.bf16.gmra.mxu0 %v1593
        %v1633 = vpop.f32.mrf.mxu0
        %v1634 = vadd.f32 0.0, %v1633
        %v1635 = vpop.f32.mrf.mxu0
        %v1636 = vadd.f32 0.0, %v1635
        %1637 = vmatmul.bf16.gmra.mxu0 %v1595
        %v1638 = vpop.f32.mrf.mxu0
        %v1639 = vadd.f32 0.0, %v1638
        %v1640 = vpop.f32.mrf.mxu0
        %v1641 = vadd.f32 0.0, %v1640
        %1642 = vmatmul.bf16.gmra.mxu0 %v1597
        %v1643 = vpop.f32.mrf.mxu0
        %v1644 = vadd.f32 0.0, %v1643
        %v1645 = vpop.f32.mrf.mxu0
        %v1646 = vadd.f32 0.0, %v1645
        %1647 = vdwg.mxu0
        %1648 = vst.msk [vmem:[#allocation3] sm:$0xff] %vm1500, %v1609
        %1649 = vst.msk [vmem:[#allocation3 + $0x8] sm:$0xff] %vm1500, %v1611
        %1650 = vst.msk [vmem:[#allocation3 + $0x10] sm:$0xff] %vm1500, %v1614
        %1651 = vst.msk [vmem:[#allocation3 + $0x18] sm:$0xff] %vm1500, %v1616
        %1652 = vst.msk [vmem:[#allocation3 + $0x20] sm:$0xff] %vm1500, %v1619
        %1653 = vst.msk [vmem:[#allocation3 + $0x28] sm:$0xff] %vm1500, %v1621
        %1654 = vst.msk [vmem:[#allocation3 + $0x30] sm:$0xff] %vm1500, %v1624
        %1655 = vst.msk [vmem:[#allocation3 + $0x38] sm:$0xff] %vm1500, %v1626
        %1656 = vst.msk [vmem:[#allocation3 + $0x40] sm:$0xff] %vm1500, %v1629
        %1657 = vst.msk [vmem:[#allocation3 + $0x48] sm:$0xff] %vm1500, %v1631
        %1658 = vst.msk [vmem:[#allocation3 + $0x50] sm:$0xff] %vm1500, %v1634
        %1659 = vst.msk [vmem:[#allocation3 + $0x58] sm:$0xff] %vm1500, %v1636
        %1660 = vst.msk [vmem:[#allocation3 + $0x60] sm:$0xff] %vm1500, %v1639
        %1661 = vst.msk [vmem:[#allocation3 + $0x68] sm:$0xff] %vm1500, %v1641
        %1662 = vst.msk [vmem:[#allocation3 + $0x70] sm:$0xff] %vm1500, %v1644
        %1663 = vst.msk [vmem:[#allocation3 + $0x78] sm:$0xff] %vm1500, %v1646
        %s1664 = scalar_lea.vmem [#allocation2], 12
        %v1665 = vld [vmem:[%s1664] sm:$0xf]
        %v1666 = vld [vmem:[%s1664 + $0x4] sm:$0xf]
        %v1667 = vld [vmem:[%s1664 + $0x8] sm:$0x1]
        %v1668 = vld [vmem:[%s1664 + $0xc] sm:$0xf]
        %v1669 = vld [vmem:[%s1664 + $0x10] sm:$0xf]
        %v1670 = vld [vmem:[%s1664 + $0x14] sm:$0x1]
        %v1671 = vld [vmem:[%s1664 + $0x18] sm:$0xf]
        %v1672 = vld [vmem:[%s1664 + $0x1c] sm:$0xf]
        %v1673 = vld [vmem:[%s1664 + $0x20] sm:$0x1]
        %v1674 = vld [vmem:[%s1664 + $0x24] sm:$0xf]
        %v1675 = vld [vmem:[%s1664 + $0x28] sm:$0xf]
        %v1676 = vld [vmem:[%s1664 + $0x2c] sm:$0x1]
        %v1677 = vld [vmem:[%s1664 + $0x30] sm:$0xf]
        %v1678 = vld [vmem:[%s1664 + $0x34] sm:$0xf]
        %v1679 = vld [vmem:[%s1664 + $0x38] sm:$0x1]
        %v1680 = vld [vmem:[%s1664 + $0x3c] sm:$0xf]
        %v1681 = vld [vmem:[%s1664 + $0x40] sm:$0xf]
        %v1682 = vld [vmem:[%s1664 + $0x44] sm:$0x1]
        %v1683 = vld [vmem:[%s1664 + $0x48] sm:$0xf]
        %v1684 = vld [vmem:[%s1664 + $0x4c] sm:$0xf]
        %v1685 = vld [vmem:[%s1664 + $0x50] sm:$0x1]
        %v1686 = vld [vmem:[%s1664 + $0x54] sm:$0xf]
        %v1687 = vld [vmem:[%s1664 + $0x58] sm:$0xf]
        %v1688 = vld [vmem:[%s1664 + $0x5c] sm:$0x1]
        %v1705 = vunpack.c.l.b16 %v1665
        %v1706 = vunpack.c.l.b16 %v1666
        %v1707 = vunpack.c.l.b16 %v1668
        %v1708 = vunpack.c.l.b16 %v1669
        %v1709 = vunpack.c.l.b16 %v1671
        %v1710 = vunpack.c.l.b16 %v1672
        %v1711 = vunpack.c.l.b16 %v1674
        %v1712 = vunpack.c.l.b16 %v1675
        %v1713 = vunpack.c.l.b16 %v1677
        %v1714 = vunpack.c.l.b16 %v1678
        %v1715 = vunpack.c.l.b16 %v1680
        %v1716 = vunpack.c.l.b16 %v1681
        %v1717 = vunpack.c.l.b16 %v1683
        %v1718 = vunpack.c.l.b16 %v1684
        %v1719 = vunpack.c.l.b16 %v1686
        %v1720 = vunpack.c.l.b16 %v1687
        %v1721 = vpack.c.b16 %v1706, %v1705
        %v1722 = vpack.c.b16 %v1708, %v1707
        %v1723 = vpack.c.b16 %v1710, %v1709
        %v1724 = vpack.c.b16 %v1712, %v1711
        %v1725 = vpack.c.b16 %v1714, %v1713
        %v1726 = vpack.c.b16 %v1716, %v1715
        %v1727 = vpack.c.b16 %v1718, %v1717
        %v1728 = vpack.c.b16 %v1720, %v1719
        %v1737 = vunpack.c.l.b16 %v1667
        %v1738 = vunpack.c.l.b16 %v1670
        %v1739 = vunpack.c.l.b16 %v1673
        %v1740 = vunpack.c.l.b16 %v1676
        %v1741 = vunpack.c.l.b16 %v1679
        %v1742 = vunpack.c.l.b16 %v1682
        %v1743 = vunpack.c.l.b16 %v1685
        %v1744 = vunpack.c.l.b16 %v1688
        %v1745 = vpack.c.b16 %v1737, %v1737
        %v1746 = vpack.c.b16 %v1738, %v1738
        %v1747 = vpack.c.b16 %v1739, %v1739
        %v1748 = vpack.c.b16 %v1740, %v1740
        %v1749 = vpack.c.b16 %v1741, %v1741
        %v1750 = vpack.c.b16 %v1742, %v1742
        %v1751 = vpack.c.b16 %v1743, %v1743
        %v1752 = vpack.c.b16 %v1744, %v1744
        %v1754 = vshrl.u32 %v1721, 16
        %v1756 = vshll.u32 %v1721, 16
        %v1758 = vrot.slane %v1756, 1
        %v1759 = vor.u32 %v1754, %v1758
        %v1761 = vshll.u32 %v1745, 16
        %v1763 = vrot.slane %v1761, 1
        %v1764 = vsel %vm1346, %v1759, %v1763
        %v1766 = vshrl.u32 %v1722, 16
        %v1768 = vshll.u32 %v1722, 16
        %v1770 = vrot.slane %v1768, 1
        %v1771 = vor.u32 %v1766, %v1770
        %v1773 = vshll.u32 %v1746, 16
        %v1775 = vrot.slane %v1773, 1
        %v1776 = vsel %vm1346, %v1771, %v1775
        %v1778 = vshrl.u32 %v1723, 16
        %v1780 = vshll.u32 %v1723, 16
        %v1782 = vrot.slane %v1780, 1
        %v1783 = vor.u32 %v1778, %v1782
        %v1785 = vshll.u32 %v1747, 16
        %v1787 = vrot.slane %v1785, 1
        %v1788 = vsel %vm1346, %v1783, %v1787
        %v1790 = vshrl.u32 %v1724, 16
        %v1792 = vshll.u32 %v1724, 16
        %v1794 = vrot.slane %v1792, 1
        %v1795 = vor.u32 %v1790, %v1794
        %v1797 = vshll.u32 %v1748, 16
        %v1799 = vrot.slane %v1797, 1
        %v1800 = vsel %vm1346, %v1795, %v1799
        %v1802 = vshrl.u32 %v1725, 16
        %v1804 = vshll.u32 %v1725, 16
        %v1806 = vrot.slane %v1804, 1
        %v1807 = vor.u32 %v1802, %v1806
        %v1809 = vshll.u32 %v1749, 16
        %v1811 = vrot.slane %v1809, 1
        %v1812 = vsel %vm1346, %v1807, %v1811
        %v1814 = vshrl.u32 %v1726, 16
        %v1816 = vshll.u32 %v1726, 16
        %v1818 = vrot.slane %v1816, 1
        %v1819 = vor.u32 %v1814, %v1818
        %v1821 = vshll.u32 %v1750, 16
        %v1823 = vrot.slane %v1821, 1
        %v1824 = vsel %vm1346, %v1819, %v1823
        %v1826 = vshrl.u32 %v1727, 16
        %v1828 = vshll.u32 %v1727, 16
        %v1830 = vrot.slane %v1828, 1
        %v1831 = vor.u32 %v1826, %v1830
        %v1833 = vshll.u32 %v1751, 16
        %v1835 = vrot.slane %v1833, 1
        %v1836 = vsel %vm1346, %v1831, %v1835
        %v1838 = vshrl.u32 %v1728, 16
        %v1840 = vshll.u32 %v1728, 16
        %v1842 = vrot.slane %v1840, 1
        %v1843 = vor.u32 %v1838, %v1842
        %v1845 = vshll.u32 %v1752, 16
        %v1847 = vrot.slane %v1845, 1
        %v1848 = vsel %vm1346, %v1843, %v1847
        %1849 = vrot.lane.b32.xlu0 %v1764, 32
        %v1850 = vpop.permute.xlu0 %1849
        %1851 = vrot.lane.b32.xlu0 %v1776, 32
        %v1852 = vpop.permute.xlu0 %1851
        %1853 = vrot.lane.b32.xlu0 %v1788, 32
        %v1854 = vpop.permute.xlu0 %1853
        %1855 = vrot.lane.b32.xlu0 %v1800, 32
        %v1856 = vpop.permute.xlu0 %1855
        %1857 = vrot.lane.b32.xlu0 %v1812, 32
        %v1858 = vpop.permute.xlu0 %1857
        %1859 = vrot.lane.b32.xlu0 %v1824, 32
        %v1860 = vpop.permute.xlu0 %1859
        %1861 = vrot.lane.b32.xlu0 %v1836, 32
        %v1862 = vpop.permute.xlu0 %1861
        %1863 = vrot.lane.b32.xlu0 %v1848, 32
        %v1864 = vpop.permute.xlu0 %1863
        %v1865 = vrot.slane %v1721, 1
        %v1866 = vrot.slane %v1745, 1
        %v1867 = vsel %vm1459, %v1865, %v1866
        %v1868 = vrot.slane %v1722, 1
        %v1869 = vrot.slane %v1746, 1
        %v1870 = vsel %vm1459, %v1868, %v1869
        %v1871 = vrot.slane %v1723, 1
        %v1872 = vrot.slane %v1747, 1
        %v1873 = vsel %vm1459, %v1871, %v1872
        %v1874 = vrot.slane %v1724, 1
        %v1875 = vrot.slane %v1748, 1
        %v1876 = vsel %vm1459, %v1874, %v1875
        %v1877 = vrot.slane %v1725, 1
        %v1878 = vrot.slane %v1749, 1
        %v1879 = vsel %vm1459, %v1877, %v1878
        %v1880 = vrot.slane %v1726, 1
        %v1881 = vrot.slane %v1750, 1
        %v1882 = vsel %vm1459, %v1880, %v1881
        %v1883 = vrot.slane %v1727, 1
        %v1884 = vrot.slane %v1751, 1
        %v1885 = vsel %vm1459, %v1883, %v1884
        %v1886 = vrot.slane %v1728, 1
        %v1887 = vrot.slane %v1752, 1
        %v1888 = vsel %vm1459, %v1886, %v1887
        %1889 = vrot.lane.b32.xlu0 %v1867, 64
        %v1890 = vpop.permute.xlu0 %1889
        %1891 = vrot.lane.b32.xlu0 %v1870, 64
        %v1892 = vpop.permute.xlu0 %1891
        %1893 = vrot.lane.b32.xlu0 %v1873, 64
        %v1894 = vpop.permute.xlu0 %1893
        %1895 = vrot.lane.b32.xlu0 %v1876, 64
        %v1896 = vpop.permute.xlu0 %1895
        %1897 = vrot.lane.b32.xlu0 %v1879, 64
        %v1898 = vpop.permute.xlu0 %1897
        %1899 = vrot.lane.b32.xlu0 %v1882, 64
        %v1900 = vpop.permute.xlu0 %1899
        %1901 = vrot.lane.b32.xlu0 %v1885, 64
        %v1902 = vpop.permute.xlu0 %1901
        %1903 = vrot.lane.b32.xlu0 %v1888, 64
        %v1904 = vpop.permute.xlu0 %1903
        %v1906 = vsel %vm1500, %v1721, %v1850
        %v1908 = vsel %vm1500, %v1722, %v1852
        %v1910 = vsel %vm1500, %v1723, %v1854
        %v1912 = vsel %vm1500, %v1724, %v1856
        %v1914 = vsel %vm1500, %v1725, %v1858
        %v1916 = vsel %vm1500, %v1726, %v1860
        %v1918 = vsel %vm1500, %v1727, %v1862
        %v1920 = vsel %vm1500, %v1728, %v1864
        %v1922 = vsel %vm1517, %v1906, %v1890
        %v1924 = vsel %vm1517, %v1908, %v1892
        %v1926 = vsel %vm1517, %v1910, %v1894
        %v1928 = vsel %vm1517, %v1912, %v1896
        %v1930 = vsel %vm1517, %v1914, %v1898
        %v1932 = vsel %vm1517, %v1916, %v1900
        %v1934 = vsel %vm1517, %v1918, %v1902
        %v1936 = vsel %vm1517, %v1920, %v1904
        %s1937 = scalar_lea.vmem %s8, 48
        %v1938 = vld [vmem:[%s1937] sm:$0xf]
        %v1939 = vld [vmem:[%s1937 + $0x4] sm:$0xf]
        %v1940 = vld [vmem:[%s1937 + $0x8] sm:$0xf]
        %v1941 = vld [vmem:[%s1937 + $0xc] sm:$0xf]
        %v1942 = vld [vmem:[%s1937 + $0x10] sm:$0xf]
        %v1943 = vld [vmem:[%s1937 + $0x14] sm:$0xf]
        %v1944 = vld [vmem:[%s1937 + $0x18] sm:$0xf]
        %v1945 = vld [vmem:[%s1937 + $0x1c] sm:$0xf]
        %v1946 = vld [vmem:[%s1937 + $0x20] sm:$0xf]
        %v1947 = vld [vmem:[%s1937 + $0x24] sm:$0xf]
        %v1948 = vld [vmem:[%s1937 + $0x28] sm:$0xf]
        %v1949 = vld [vmem:[%s1937 + $0x2c] sm:$0xf]
        %v1962 = vunpack.c.l.b16 %v1938
        %v1963 = vunpack.c.l.b16 %v1939
        %v1964 = vunpack.c.l.b16 %v1940
        %v1965 = vunpack.c.l.b16 %v1941
        %v1966 = vunpack.c.l.b16 %v1942
        %v1967 = vunpack.c.l.b16 %v1943
        %v1968 = vunpack.c.l.b16 %v1944
        %v1969 = vunpack.c.l.b16 %v1945
        %v1970 = vunpack.c.l.b16 %v1946
        %v1971 = vunpack.c.l.b16 %v1947
        %v1972 = vunpack.c.l.b16 %v1948
        %v1973 = vunpack.c.l.b16 %v1949
        %v1974 = vpack.c.b16 %v1963, %v1962
        %v1975 = vpack.c.b16 %v1965, %v1964
        %v1976 = vpack.c.b16 %v1967, %v1966
        %v1977 = vpack.c.b16 %v1969, %v1968
        %v1978 = vpack.c.b16 %v1971, %v1970
        %v1979 = vpack.c.b16 %v1973, %v1972
        %v1986 = vsel %vm1582, %v1922, 0
        %v1988 = vsel %vm1582, %v1924, 0
        %v1990 = vsel %vm1582, %v1926, 0
        %v1992 = vsel %vm1582, %v1928, 0
        %v1994 = vsel %vm1582, %v1930, 0
        %v1996 = vsel %vm1582, %v1932, 0
        %v1998 = vsel %vm1582, %v1934, 0
        %v2000 = vsel %vm1582, %v1936, 0
        %2002 = vmatpush.bf16.msra.mxu0 0
        %2003 = vmatpush.bf16.msra.mxu0 0
        %2004 = vmatpush.bf16.msra.mxu0 %v1979
        %2005 = vmatpush.bf16.msra.mxu0 %v1978
        %2006 = vmatpush.bf16.msra.mxu0 %v1977
        %2007 = vmatpush.bf16.msra.mxu0 %v1976
        %2008 = vmatpush.bf16.msra.mxu0 %v1975
        %2009 = vmatpush.bf16.msra.mxu0 %v1974
        %2010 = vmatmul.bf16.gmra.mxu0 %v1986
        %v2011 = vpop.f32.mrf.mxu0
        %v2012 = vadd.f32 0.0, %v2011
        %v2013 = vpop.f32.mrf.mxu0
        %v2014 = vadd.f32 0.0, %v2013
        %2015 = vmatmul.bf16.gmra.mxu0 %v1988
        %v2016 = vpop.f32.mrf.mxu0
        %v2017 = vadd.f32 0.0, %v2016
        %v2018 = vpop.f32.mrf.mxu0
        %v2019 = vadd.f32 0.0, %v2018
        %2020 = vmatmul.bf16.gmra.mxu0 %v1990
        %v2021 = vpop.f32.mrf.mxu0
        %v2022 = vadd.f32 0.0, %v2021
        %v2023 = vpop.f32.mrf.mxu0
        %v2024 = vadd.f32 0.0, %v2023
        %2025 = vmatmul.bf16.gmra.mxu0 %v1992
        %v2026 = vpop.f32.mrf.mxu0
        %v2027 = vadd.f32 0.0, %v2026
        %v2028 = vpop.f32.mrf.mxu0
        %v2029 = vadd.f32 0.0, %v2028
        %2030 = vmatmul.bf16.gmra.mxu0 %v1994
        %v2031 = vpop.f32.mrf.mxu0
        %v2032 = vadd.f32 0.0, %v2031
        %v2033 = vpop.f32.mrf.mxu0
        %v2034 = vadd.f32 0.0, %v2033
        %2035 = vmatmul.bf16.gmra.mxu0 %v1996
        %v2036 = vpop.f32.mrf.mxu0
        %v2037 = vadd.f32 0.0, %v2036
        %v2038 = vpop.f32.mrf.mxu0
        %v2039 = vadd.f32 0.0, %v2038
        %2040 = vmatmul.bf16.gmra.mxu0 %v1998
        %v2041 = vpop.f32.mrf.mxu0
        %v2042 = vadd.f32 0.0, %v2041
        %v2043 = vpop.f32.mrf.mxu0
        %v2044 = vadd.f32 0.0, %v2043
        %2045 = vmatmul.bf16.gmra.mxu0 %v2000
        %v2046 = vpop.f32.mrf.mxu0
        %v2047 = vadd.f32 0.0, %v2046
        %v2048 = vpop.f32.mrf.mxu0
        %v2049 = vadd.f32 0.0, %v2048
        %2050 = vdwg.mxu0
        %v2051 = vld [vmem:[#allocation3] sm:$0xff]
        %v2052 = vld [vmem:[#allocation3 + $0x8] sm:$0xff]
        %v2053 = vld [vmem:[#allocation3 + $0x10] sm:$0xff]
        %v2054 = vld [vmem:[#allocation3 + $0x18] sm:$0xff]
        %v2055 = vld [vmem:[#allocation3 + $0x20] sm:$0xff]
        %v2056 = vld [vmem:[#allocation3 + $0x28] sm:$0xff]
        %v2057 = vld [vmem:[#allocation3 + $0x30] sm:$0xff]
        %v2058 = vld [vmem:[#allocation3 + $0x38] sm:$0xff]
        %v2059 = vld [vmem:[#allocation3 + $0x40] sm:$0xff]
        %v2060 = vld [vmem:[#allocation3 + $0x48] sm:$0xff]
        %v2061 = vld [vmem:[#allocation3 + $0x50] sm:$0xff]
        %v2062 = vld [vmem:[#allocation3 + $0x58] sm:$0xff]
        %v2063 = vld [vmem:[#allocation3 + $0x60] sm:$0xff]
        %v2064 = vld [vmem:[#allocation3 + $0x68] sm:$0xff]
        %v2065 = vld [vmem:[#allocation3 + $0x70] sm:$0xff]
        %v2066 = vld [vmem:[#allocation3 + $0x78] sm:$0xff]
        %v2067 = vadd.f32 %v2051, %v2012
        %v2068 = vadd.f32 %v2052, %v2014
        %v2069 = vadd.f32 %v2053, %v2017
        %v2070 = vadd.f32 %v2054, %v2019
        %v2071 = vadd.f32 %v2055, %v2022
        %v2072 = vadd.f32 %v2056, %v2024
        %v2073 = vadd.f32 %v2057, %v2027
        %v2074 = vadd.f32 %v2058, %v2029
        %v2075 = vadd.f32 %v2059, %v2032
        %v2076 = vadd.f32 %v2060, %v2034
        %v2077 = vadd.f32 %v2061, %v2037
        %v2078 = vadd.f32 %v2062, %v2039
        %v2079 = vadd.f32 %v2063, %v2042
        %v2080 = vadd.f32 %v2064, %v2044
        %v2081 = vadd.f32 %v2065, %v2047
        %v2082 = vadd.f32 %v2066, %v2049
        %2083 = vst.msk [vmem:[#allocation3] sm:$0xff] %vm1500, %v2067
        %2084 = vst.msk [vmem:[#allocation3 + $0x8] sm:$0xff] %vm1500, %v2068
        %2085 = vst.msk [vmem:[#allocation3 + $0x10] sm:$0xff] %vm1500, %v2069
        %2086 = vst.msk [vmem:[#allocation3 + $0x18] sm:$0xff] %vm1500, %v2070
        %2087 = vst.msk [vmem:[#allocation3 + $0x20] sm:$0xff] %vm1500, %v2071
        %2088 = vst.msk [vmem:[#allocation3 + $0x28] sm:$0xff] %vm1500, %v2072
        %2089 = vst.msk [vmem:[#allocation3 + $0x30] sm:$0xff] %vm1500, %v2073
        %2090 = vst.msk [vmem:[#allocation3 + $0x38] sm:$0xff] %vm1500, %v2074
        %2091 = vst.msk [vmem:[#allocation3 + $0x40] sm:$0xff] %vm1500, %v2075
        %2092 = vst.msk [vmem:[#allocation3 + $0x48] sm:$0xff] %vm1500, %v2076
        %2093 = vst.msk [vmem:[#allocation3 + $0x50] sm:$0xff] %vm1500, %v2077
        %2094 = vst.msk [vmem:[#allocation3 + $0x58] sm:$0xff] %vm1500, %v2078
        %2095 = vst.msk [vmem:[#allocation3 + $0x60] sm:$0xff] %vm1500, %v2079
        %2096 = vst.msk [vmem:[#allocation3 + $0x68] sm:$0xff] %vm1500, %v2080
        %2097 = vst.msk [vmem:[#allocation3 + $0x70] sm:$0xff] %vm1500, %v2081
        %2098 = vst.msk [vmem:[#allocation3 + $0x78] sm:$0xff] %vm1500, %v2082
        %s2099 = scalar_lea.vmem [#allocation2], 24
        %v2100 = vld [vmem:[%s2099] sm:$0xf]
        %v2101 = vld [vmem:[%s2099 + $0x4] sm:$0xf]
        %v2102 = vld [vmem:[%s2099 + $0x8] sm:$0x1]
        %v2103 = vld [vmem:[%s2099 + $0xc] sm:$0xf]
        %v2104 = vld [vmem:[%s2099 + $0x10] sm:$0xf]
        %v2105 = vld [vmem:[%s2099 + $0x14] sm:$0x1]
        %v2106 = vld [vmem:[%s2099 + $0x18] sm:$0xf]
        %v2107 = vld [vmem:[%s2099 + $0x1c] sm:$0xf]
        %v2108 = vld [vmem:[%s2099 + $0x20] sm:$0x1]
        %v2109 = vld [vmem:[%s2099 + $0x24] sm:$0xf]
        %v2110 = vld [vmem:[%s2099 + $0x28] sm:$0xf]
        %v2111 = vld [vmem:[%s2099 + $0x2c] sm:$0x1]
        %v2112 = vld [vmem:[%s2099 + $0x30] sm:$0xf]
        %v2113 = vld [vmem:[%s2099 + $0x34] sm:$0xf]
        %v2114 = vld [vmem:[%s2099 + $0x38] sm:$0x1]
        %v2115 = vld [vmem:[%s2099 + $0x3c] sm:$0xf]
        %v2116 = vld [vmem:[%s2099 + $0x40] sm:$0xf]
        %v2117 = vld [vmem:[%s2099 + $0x44] sm:$0x1]
        %v2118 = vld [vmem:[%s2099 + $0x48] sm:$0xf]
        %v2119 = vld [vmem:[%s2099 + $0x4c] sm:$0xf]
        %v2120 = vld [vmem:[%s2099 + $0x50] sm:$0x1]
        %v2121 = vld [vmem:[%s2099 + $0x54] sm:$0xf]
        %v2122 = vld [vmem:[%s2099 + $0x58] sm:$0xf]
        %v2123 = vld [vmem:[%s2099 + $0x5c] sm:$0x1]
        %v2140 = vunpack.c.l.b16 %v2100
        %v2141 = vunpack.c.l.b16 %v2101
        %v2142 = vunpack.c.l.b16 %v2103
        %v2143 = vunpack.c.l.b16 %v2104
        %v2144 = vunpack.c.l.b16 %v2106
        %v2145 = vunpack.c.l.b16 %v2107
        %v2146 = vunpack.c.l.b16 %v2109
        %v2147 = vunpack.c.l.b16 %v2110
        %v2148 = vunpack.c.l.b16 %v2112
        %v2149 = vunpack.c.l.b16 %v2113
        %v2150 = vunpack.c.l.b16 %v2115
        %v2151 = vunpack.c.l.b16 %v2116
        %v2152 = vunpack.c.l.b16 %v2118
        %v2153 = vunpack.c.l.b16 %v2119
        %v2154 = vunpack.c.l.b16 %v2121
        %v2155 = vunpack.c.l.b16 %v2122
        %v2156 = vpack.c.b16 %v2141, %v2140
        %v2157 = vpack.c.b16 %v2143, %v2142
        %v2158 = vpack.c.b16 %v2145, %v2144
        %v2159 = vpack.c.b16 %v2147, %v2146
        %v2160 = vpack.c.b16 %v2149, %v2148
        %v2161 = vpack.c.b16 %v2151, %v2150
        %v2162 = vpack.c.b16 %v2153, %v2152
        %v2163 = vpack.c.b16 %v2155, %v2154
        %v2172 = vunpack.c.l.b16 %v2102
        %v2173 = vunpack.c.l.b16 %v2105
        %v2174 = vunpack.c.l.b16 %v2108
        %v2175 = vunpack.c.l.b16 %v2111
        %v2176 = vunpack.c.l.b16 %v2114
        %v2177 = vunpack.c.l.b16 %v2117
        %v2178 = vunpack.c.l.b16 %v2120
        %v2179 = vunpack.c.l.b16 %v2123
        %v2180 = vpack.c.b16 %v2172, %v2172
        %v2181 = vpack.c.b16 %v2173, %v2173
        %v2182 = vpack.c.b16 %v2174, %v2174
        %v2183 = vpack.c.b16 %v2175, %v2175
        %v2184 = vpack.c.b16 %v2176, %v2176
        %v2185 = vpack.c.b16 %v2177, %v2177
        %v2186 = vpack.c.b16 %v2178, %v2178
        %v2187 = vpack.c.b16 %v2179, %v2179
        %v2189 = vshrl.u32 %v2156, 16
        %v2191 = vshll.u32 %v2156, 16
        %v2193 = vrot.slane %v2191, 1
        %v2194 = vor.u32 %v2189, %v2193
        %v2196 = vshll.u32 %v2180, 16
        %v2198 = vrot.slane %v2196, 1
        %v2199 = vsel %vm1346, %v2194, %v2198
        %v2201 = vshrl.u32 %v2157, 16
        %v2203 = vshll.u32 %v2157, 16
        %v2205 = vrot.slane %v2203, 1
        %v2206 = vor.u32 %v2201, %v2205
        %v2208 = vshll.u32 %v2181, 16
        %v2210 = vrot.slane %v2208, 1
        %v2211 = vsel %vm1346, %v2206, %v2210
        %v2213 = vshrl.u32 %v2158, 16
        %v2215 = vshll.u32 %v2158, 16
        %v2217 = vrot.slane %v2215, 1
        %v2218 = vor.u32 %v2213, %v2217
        %v2220 = vshll.u32 %v2182, 16
        %v2222 = vrot.slane %v2220, 1
        %v2223 = vsel %vm1346, %v2218, %v2222
        %v2225 = vshrl.u32 %v2159, 16
        %v2227 = vshll.u32 %v2159, 16
        %v2229 = vrot.slane %v2227, 1
        %v2230 = vor.u32 %v2225, %v2229
        %v2232 = vshll.u32 %v2183, 16
        %v2234 = vrot.slane %v2232, 1
        %v2235 = vsel %vm1346, %v2230, %v2234
        %v2237 = vshrl.u32 %v2160, 16
        %v2239 = vshll.u32 %v2160, 16
        %v2241 = vrot.slane %v2239, 1
        %v2242 = vor.u32 %v2237, %v2241
        %v2244 = vshll.u32 %v2184, 16
        %v2246 = vrot.slane %v2244, 1
        %v2247 = vsel %vm1346, %v2242, %v2246
        %v2249 = vshrl.u32 %v2161, 16
        %v2251 = vshll.u32 %v2161, 16
        %v2253 = vrot.slane %v2251, 1
        %v2254 = vor.u32 %v2249, %v2253
        %v2256 = vshll.u32 %v2185, 16
        %v2258 = vrot.slane %v2256, 1
        %v2259 = vsel %vm1346, %v2254, %v2258
        %v2261 = vshrl.u32 %v2162, 16
        %v2263 = vshll.u32 %v2162, 16
        %v2265 = vrot.slane %v2263, 1
        %v2266 = vor.u32 %v2261, %v2265
        %v2268 = vshll.u32 %v2186, 16
        %v2270 = vrot.slane %v2268, 1
        %v2271 = vsel %vm1346, %v2266, %v2270
        %v2273 = vshrl.u32 %v2163, 16
        %v2275 = vshll.u32 %v2163, 16
        %v2277 = vrot.slane %v2275, 1
        %v2278 = vor.u32 %v2273, %v2277
        %v2280 = vshll.u32 %v2187, 16
        %v2282 = vrot.slane %v2280, 1
        %v2283 = vsel %vm1346, %v2278, %v2282
        %2284 = vrot.lane.b32.xlu0 %v2199, 32
        %v2285 = vpop.permute.xlu0 %2284
        %2286 = vrot.lane.b32.xlu0 %v2211, 32
        %v2287 = vpop.permute.xlu0 %2286
        %2288 = vrot.lane.b32.xlu0 %v2223, 32
        %v2289 = vpop.permute.xlu0 %2288
        %2290 = vrot.lane.b32.xlu0 %v2235, 32
        %v2291 = vpop.permute.xlu0 %2290
        %2292 = vrot.lane.b32.xlu0 %v2247, 32
        %v2293 = vpop.permute.xlu0 %2292
        %2294 = vrot.lane.b32.xlu0 %v2259, 32
        %v2295 = vpop.permute.xlu0 %2294
        %2296 = vrot.lane.b32.xlu0 %v2271, 32
        %v2297 = vpop.permute.xlu0 %2296
        %2298 = vrot.lane.b32.xlu0 %v2283, 32
        %v2299 = vpop.permute.xlu0 %2298
        %v2300 = vrot.slane %v2156, 1
        %v2301 = vrot.slane %v2180, 1
        %v2302 = vsel %vm1459, %v2300, %v2301
        %v2303 = vrot.slane %v2157, 1
        %v2304 = vrot.slane %v2181, 1
        %v2305 = vsel %vm1459, %v2303, %v2304
        %v2306 = vrot.slane %v2158, 1
        %v2307 = vrot.slane %v2182, 1
        %v2308 = vsel %vm1459, %v2306, %v2307
        %v2309 = vrot.slane %v2159, 1
        %v2310 = vrot.slane %v2183, 1
        %v2311 = vsel %vm1459, %v2309, %v2310
        %v2312 = vrot.slane %v2160, 1
        %v2313 = vrot.slane %v2184, 1
        %v2314 = vsel %vm1459, %v2312, %v2313
        %v2315 = vrot.slane %v2161, 1
        %v2316 = vrot.slane %v2185, 1
        %v2317 = vsel %vm1459, %v2315, %v2316
        %v2318 = vrot.slane %v2162, 1
        %v2319 = vrot.slane %v2186, 1
        %v2320 = vsel %vm1459, %v2318, %v2319
        %v2321 = vrot.slane %v2163, 1
        %v2322 = vrot.slane %v2187, 1
        %v2323 = vsel %vm1459, %v2321, %v2322
        %2324 = vrot.lane.b32.xlu0 %v2302, 64
        %v2325 = vpop.permute.xlu0 %2324
        %2326 = vrot.lane.b32.xlu0 %v2305, 64
        %v2327 = vpop.permute.xlu0 %2326
        %2328 = vrot.lane.b32.xlu0 %v2308, 64
        %v2329 = vpop.permute.xlu0 %2328
        %2330 = vrot.lane.b32.xlu0 %v2311, 64
        %v2331 = vpop.permute.xlu0 %2330
        %2332 = vrot.lane.b32.xlu0 %v2314, 64
        %v2333 = vpop.permute.xlu0 %2332
        %2334 = vrot.lane.b32.xlu0 %v2317, 64
        %v2335 = vpop.permute.xlu0 %2334
        %2336 = vrot.lane.b32.xlu0 %v2320, 64
        %v2337 = vpop.permute.xlu0 %2336
        %2338 = vrot.lane.b32.xlu0 %v2323, 64
        %v2339 = vpop.permute.xlu0 %2338
        %v2341 = vsel %vm1500, %v2156, %v2285
        %v2343 = vsel %vm1500, %v2157, %v2287
        %v2345 = vsel %vm1500, %v2158, %v2289
        %v2347 = vsel %vm1500, %v2159, %v2291
        %v2349 = vsel %vm1500, %v2160, %v2293
        %v2351 = vsel %vm1500, %v2161, %v2295
        %v2353 = vsel %vm1500, %v2162, %v2297
        %v2355 = vsel %vm1500, %v2163, %v2299
        %v2357 = vsel %vm1517, %v2341, %v2325
        %v2359 = vsel %vm1517, %v2343, %v2327
        %v2361 = vsel %vm1517, %v2345, %v2329
        %v2363 = vsel %vm1517, %v2347, %v2331
        %v2365 = vsel %vm1517, %v2349, %v2333
        %v2367 = vsel %vm1517, %v2351, %v2335
        %v2369 = vsel %vm1517, %v2353, %v2337
        %v2371 = vsel %vm1517, %v2355, %v2339
        %s2372 = scalar_lea.vmem %s8, 96
        %v2373 = vld [vmem:[%s2372] sm:$0xf]
        %v2374 = vld [vmem:[%s2372 + $0x4] sm:$0xf]
        %v2375 = vld [vmem:[%s2372 + $0x8] sm:$0xf]
        %v2376 = vld [vmem:[%s2372 + $0xc] sm:$0xf]
        %v2377 = vld [vmem:[%s2372 + $0x10] sm:$0xf]
        %v2378 = vld [vmem:[%s2372 + $0x14] sm:$0xf]
        %v2379 = vld [vmem:[%s2372 + $0x18] sm:$0xf]
        %v2380 = vld [vmem:[%s2372 + $0x1c] sm:$0xf]
        %v2381 = vld [vmem:[%s2372 + $0x20] sm:$0xf]
        %v2382 = vld [vmem:[%s2372 + $0x24] sm:$0xf]
        %v2383 = vld [vmem:[%s2372 + $0x28] sm:$0xf]
        %v2384 = vld [vmem:[%s2372 + $0x2c] sm:$0xf]
        %v2397 = vunpack.c.l.b16 %v2373
        %v2398 = vunpack.c.l.b16 %v2374
        %v2399 = vunpack.c.l.b16 %v2375
        %v2400 = vunpack.c.l.b16 %v2376
        %v2401 = vunpack.c.l.b16 %v2377
        %v2402 = vunpack.c.l.b16 %v2378
        %v2403 = vunpack.c.l.b16 %v2379
        %v2404 = vunpack.c.l.b16 %v2380
        %v2405 = vunpack.c.l.b16 %v2381
        %v2406 = vunpack.c.l.b16 %v2382
        %v2407 = vunpack.c.l.b16 %v2383
        %v2408 = vunpack.c.l.b16 %v2384
        %v2409 = vpack.c.b16 %v2398, %v2397
        %v2410 = vpack.c.b16 %v2400, %v2399
        %v2411 = vpack.c.b16 %v2402, %v2401
        %v2412 = vpack.c.b16 %v2404, %v2403
        %v2413 = vpack.c.b16 %v2406, %v2405
        %v2414 = vpack.c.b16 %v2408, %v2407
        %v2421 = vsel %vm1582, %v2357, 0
        %v2423 = vsel %vm1582, %v2359, 0
        %v2425 = vsel %vm1582, %v2361, 0
        %v2427 = vsel %vm1582, %v2363, 0
        %v2429 = vsel %vm1582, %v2365, 0
        %v2431 = vsel %vm1582, %v2367, 0
        %v2433 = vsel %vm1582, %v2369, 0
        %v2435 = vsel %vm1582, %v2371, 0
        %2437 = vmatpush.bf16.msra.mxu0 0
        %2438 = vmatpush.bf16.msra.mxu0 0
        %2439 = vmatpush.bf16.msra.mxu0 %v2414
        %2440 = vmatpush.bf16.msra.mxu0 %v2413
        %2441 = vmatpush.bf16.msra.mxu0 %v2412
        %2442 = vmatpush.bf16.msra.mxu0 %v2411
        %2443 = vmatpush.bf16.msra.mxu0 %v2410
        %2444 = vmatpush.bf16.msra.mxu0 %v2409
        %2445 = vmatmul.bf16.gmra.mxu0 %v2421
        %v2446 = vpop.f32.mrf.mxu0
        %v2447 = vadd.f32 0.0, %v2446
        %v2448 = vpop.f32.mrf.mxu0
        %v2449 = vadd.f32 0.0, %v2448
        %2450 = vmatmul.bf16.gmra.mxu0 %v2423
        %v2451 = vpop.f32.mrf.mxu0
        %v2452 = vadd.f32 0.0, %v2451
        %v2453 = vpop.f32.mrf.mxu0
        %v2454 = vadd.f32 0.0, %v2453
        %2455 = vmatmul.bf16.gmra.mxu0 %v2425
        %v2456 = vpop.f32.mrf.mxu0
        %v2457 = vadd.f32 0.0, %v2456
        %v2458 = vpop.f32.mrf.mxu0
        %v2459 = vadd.f32 0.0, %v2458
        %2460 = vmatmul.bf16.gmra.mxu0 %v2427
        %v2461 = vpop.f32.mrf.mxu0
        %v2462 = vadd.f32 0.0, %v2461
        %v2463 = vpop.f32.mrf.mxu0
        %v2464 = vadd.f32 0.0, %v2463
        %2465 = vmatmul.bf16.gmra.mxu0 %v2429
        %v2466 = vpop.f32.mrf.mxu0
        %v2467 = vadd.f32 0.0, %v2466
        %v2468 = vpop.f32.mrf.mxu0
        %v2469 = vadd.f32 0.0, %v2468
        %2470 = vmatmul.bf16.gmra.mxu0 %v2431
        %v2471 = vpop.f32.mrf.mxu0
        %v2472 = vadd.f32 0.0, %v2471
        %v2473 = vpop.f32.mrf.mxu0
        %v2474 = vadd.f32 0.0, %v2473
        %2475 = vmatmul.bf16.gmra.mxu0 %v2433
        %v2476 = vpop.f32.mrf.mxu0
        %v2477 = vadd.f32 0.0, %v2476
        %v2478 = vpop.f32.mrf.mxu0
        %v2479 = vadd.f32 0.0, %v2478
        %2480 = vmatmul.bf16.gmra.mxu0 %v2435
        %v2481 = vpop.f32.mrf.mxu0
        %v2482 = vadd.f32 0.0, %v2481
        %v2483 = vpop.f32.mrf.mxu0
        %v2484 = vadd.f32 0.0, %v2483
        %2485 = vdwg.mxu0
        %v2486 = vld [vmem:[#allocation3] sm:$0xff]
        %v2487 = vld [vmem:[#allocation3 + $0x8] sm:$0xff]
        %v2488 = vld [vmem:[#allocation3 + $0x10] sm:$0xff]
        %v2489 = vld [vmem:[#allocation3 + $0x18] sm:$0xff]
        %v2490 = vld [vmem:[#allocation3 + $0x20] sm:$0xff]
        %v2491 = vld [vmem:[#allocation3 + $0x28] sm:$0xff]
        %v2492 = vld [vmem:[#allocation3 + $0x30] sm:$0xff]
        %v2493 = vld [vmem:[#allocation3 + $0x38] sm:$0xff]
        %v2494 = vld [vmem:[#allocation3 + $0x40] sm:$0xff]
        %v2495 = vld [vmem:[#allocation3 + $0x48] sm:$0xff]
        %v2496 = vld [vmem:[#allocation3 + $0x50] sm:$0xff]
        %v2497 = vld [vmem:[#allocation3 + $0x58] sm:$0xff]
        %v2498 = vld [vmem:[#allocation3 + $0x60] sm:$0xff]
        %v2499 = vld [vmem:[#allocation3 + $0x68] sm:$0xff]
        %v2500 = vld [vmem:[#allocation3 + $0x70] sm:$0xff]
        %v2501 = vld [vmem:[#allocation3 + $0x78] sm:$0xff]
        %v2502 = vadd.f32 %v2486, %v2447
        %v2503 = vadd.f32 %v2487, %v2449
        %v2504 = vadd.f32 %v2488, %v2452
        %v2505 = vadd.f32 %v2489, %v2454
        %v2506 = vadd.f32 %v2490, %v2457
        %v2507 = vadd.f32 %v2491, %v2459
        %v2508 = vadd.f32 %v2492, %v2462
        %v2509 = vadd.f32 %v2493, %v2464
        %v2510 = vadd.f32 %v2494, %v2467
        %v2511 = vadd.f32 %v2495, %v2469
        %v2512 = vadd.f32 %v2496, %v2472
        %v2513 = vadd.f32 %v2497, %v2474
        %v2514 = vadd.f32 %v2498, %v2477
        %v2515 = vadd.f32 %v2499, %v2479
        %v2516 = vadd.f32 %v2500, %v2482
        %v2517 = vadd.f32 %v2501, %v2484
        %2518 = vst.msk [vmem:[#allocation3] sm:$0xff] %vm1500, %v2502
        %2519 = vst.msk [vmem:[#allocation3 + $0x8] sm:$0xff] %vm1500, %v2503
        %2520 = vst.msk [vmem:[#allocation3 + $0x10] sm:$0xff] %vm1500, %v2504
        %2521 = vst.msk [vmem:[#allocation3 + $0x18] sm:$0xff] %vm1500, %v2505
        %2522 = vst.msk [vmem:[#allocation3 + $0x20] sm:$0xff] %vm1500, %v2506
        %2523 = vst.msk [vmem:[#allocation3 + $0x28] sm:$0xff] %vm1500, %v2507
        %2524 = vst.msk [vmem:[#allocation3 + $0x30] sm:$0xff] %vm1500, %v2508
        %2525 = vst.msk [vmem:[#allocation3 + $0x38] sm:$0xff] %vm1500, %v2509
        %2526 = vst.msk [vmem:[#allocation3 + $0x40] sm:$0xff] %vm1500, %v2510
        %2527 = vst.msk [vmem:[#allocation3 + $0x48] sm:$0xff] %vm1500, %v2511
        %2528 = vst.msk [vmem:[#allocation3 + $0x50] sm:$0xff] %vm1500, %v2512
        %2529 = vst.msk [vmem:[#allocation3 + $0x58] sm:$0xff] %vm1500, %v2513
        %2530 = vst.msk [vmem:[#allocation3 + $0x60] sm:$0xff] %vm1500, %v2514
        %2531 = vst.msk [vmem:[#allocation3 + $0x68] sm:$0xff] %vm1500, %v2515
        %2532 = vst.msk [vmem:[#allocation3 + $0x70] sm:$0xff] %vm1500, %v2516
        %2533 = vst.msk [vmem:[#allocation3 + $0x78] sm:$0xff] %vm1500, %v2517
        %v2534 = vld [vmem:[#allocation3] sm:$0xff]
        %v2535 = vld [vmem:[#allocation3 + $0x8] sm:$0xff]
        %v2536 = vld [vmem:[#allocation3 + $0x10] sm:$0xff]
        %v2537 = vld [vmem:[#allocation3 + $0x18] sm:$0xff]
        %v2538 = vld [vmem:[#allocation3 + $0x20] sm:$0xff]
        %v2539 = vld [vmem:[#allocation3 + $0x28] sm:$0xff]
        %v2540 = vld [vmem:[#allocation3 + $0x30] sm:$0xff]
        %v2541 = vld [vmem:[#allocation3 + $0x38] sm:$0xff]
        %v2542 = vld [vmem:[#allocation3 + $0x40] sm:$0xff]
        %v2543 = vld [vmem:[#allocation3 + $0x48] sm:$0xff]
        %v2544 = vld [vmem:[#allocation3 + $0x50] sm:$0xff]
        %v2545 = vld [vmem:[#allocation3 + $0x58] sm:$0xff]
        %v2546 = vld [vmem:[#allocation3 + $0x60] sm:$0xff]
        %v2547 = vld [vmem:[#allocation3 + $0x68] sm:$0xff]
        %v2548 = vld [vmem:[#allocation3 + $0x70] sm:$0xff]
        %v2549 = vld [vmem:[#allocation3 + $0x78] sm:$0xff]
        %v2550 = vld [vmem:[%s9] sm:$0x1]
        %v2552 = vperm.slane %v2550, 0
        %v2554 = vmul.f32 %v2534, %v2552
        %v2555 = vmul.f32 %v2535, %v2552
        %v2556 = vmul.f32 %v2536, %v2552
        %v2557 = vmul.f32 %v2537, %v2552
        %v2558 = vmul.f32 %v2538, %v2552
        %v2559 = vmul.f32 %v2539, %v2552
        %v2560 = vmul.f32 %v2540, %v2552
        %v2561 = vmul.f32 %v2541, %v2552
        %v2562 = vmul.f32 %v2542, %v2552
        %v2563 = vmul.f32 %v2543, %v2552
        %v2564 = vmul.f32 %v2544, %v2552
        %v2565 = vmul.f32 %v2545, %v2552
        %v2566 = vmul.f32 %v2546, %v2552
        %v2567 = vmul.f32 %v2547, %v2552
        %v2568 = vmul.f32 %v2548, %v2552
        %v2569 = vmul.f32 %v2549, %v2552
        %v2570 = vld [vmem:[%s10] sm:$0x1]
        %v2572 = vperm.slane %v2570, 0
        %v2574 = vadd.f32 %v2554, %v2572
        %v2575 = vadd.f32 %v2555, %v2572
        %v2576 = vadd.f32 %v2556, %v2572
        %v2577 = vadd.f32 %v2557, %v2572
        %v2578 = vadd.f32 %v2558, %v2572
        %v2579 = vadd.f32 %v2559, %v2572
        %v2580 = vadd.f32 %v2560, %v2572
        %v2581 = vadd.f32 %v2561, %v2572
        %v2582 = vadd.f32 %v2562, %v2572
        %v2583 = vadd.f32 %v2563, %v2572
        %v2584 = vadd.f32 %v2564, %v2572
        %v2585 = vadd.f32 %v2565, %v2572
        %v2586 = vadd.f32 %v2566, %v2572
        %v2587 = vadd.f32 %v2567, %v2572
        %v2588 = vadd.f32 %v2568, %v2572
        %v2589 = vadd.f32 %v2569, %v2572
        %v2590 = vmax.f32 %v2574, 0.0
        %v2591 = vmax.f32 %v2575, 0.0
        %v2592 = vmax.f32 %v2576, 0.0
        %v2593 = vmax.f32 %v2577, 0.0
        %v2594 = vmax.f32 %v2578, 0.0
        %v2595 = vmax.f32 %v2579, 0.0
        %v2596 = vmax.f32 %v2580, 0.0
        %v2597 = vmax.f32 %v2581, 0.0
        %v2598 = vmax.f32 %v2582, 0.0
        %v2599 = vmax.f32 %v2583, 0.0
        %v2600 = vmax.f32 %v2584, 0.0
        %v2601 = vmax.f32 %v2585, 0.0
        %v2602 = vmax.f32 %v2586, 0.0
        %v2603 = vmax.f32 %v2587, 0.0
        %v2604 = vmax.f32 %v2588, 0.0
        %v2605 = vmax.f32 %v2589, 0.0
        %v2606 = vpack.c.bf16 %v2591, %v2590
        %v2607 = vpack.c.bf16 %v2593, %v2592
        %v2608 = vpack.c.bf16 %v2595, %v2594
        %v2609 = vpack.c.bf16 %v2597, %v2596
        %v2610 = vpack.c.bf16 %v2599, %v2598
        %v2611 = vpack.c.bf16 %v2601, %v2600
        %v2612 = vpack.c.bf16 %v2603, %v2602
        %v2613 = vpack.c.bf16 %v2605, %v2604
        %v2614 = vld [vmem:[%s11] sm:$0xf]
        %v2615 = vld [vmem:[%s11 + $0x4] sm:$0xf]
        %v2616 = vld [vmem:[%s11 + $0x8] sm:$0xf]
        %v2617 = vld [vmem:[%s11 + $0xc] sm:$0xf]
        %v2622 = vunpack.c.l.b16 %v2614
        %v2623 = vunpack.c.l.b16 %v2615
        %v2624 = vunpack.c.l.b16 %v2616
        %v2625 = vunpack.c.l.b16 %v2617
        %v2626 = vpack.c.b16 %v2623, %v2622
        %v2627 = vpack.c.b16 %v2625, %v2624
        %v2631 = vsel %vm1500, %v2606, 0
        %v2634 = vsel %vm1500, %v2607, 0
        %v2637 = vsel %vm1500, %v2608, 0
        %v2640 = vsel %vm1500, %v2609, 0
        %v2643 = vsel %vm1500, %v2610, 0
        %v2646 = vsel %vm1500, %v2611, 0
        %v2649 = vsel %vm1500, %v2612, 0
        %v2652 = vsel %vm1500, %v2613, 0
        %2654 = vmatpush.bf16.msra.mxu0 0
        %2655 = vmatpush.bf16.msra.mxu0 0
        %2656 = vmatpush.bf16.msra.mxu0 0
        %2657 = vmatpush.bf16.msra.mxu0 0
        %2658 = vmatpush.bf16.msra.mxu0 0
        %2659 = vmatpush.bf16.msra.mxu0 0
        %2660 = vmatpush.bf16.msra.mxu0 %v2627
        %2661 = vmatpush.bf16.msra.mxu0 %v2626
        %2662 = vmatmul.bf16.gmra.mxu0 %v2631
        %v2663 = vpop.f32.mrf.mxu0
        %v2664 = vadd.f32 0.0, %v2663
        %v2665 = vpop.f32.mrf.mxu0
        %v2666 = vadd.f32 0.0, %v2665
        %2667 = vmatmul.bf16.gmra.mxu0 %v2634
        %v2668 = vpop.f32.mrf.mxu0
        %v2669 = vadd.f32 0.0, %v2668
        %v2670 = vpop.f32.mrf.mxu0
        %v2671 = vadd.f32 0.0, %v2670
        %2672 = vmatmul.bf16.gmra.mxu0 %v2637
        %v2673 = vpop.f32.mrf.mxu0
        %v2674 = vadd.f32 0.0, %v2673
        %v2675 = vpop.f32.mrf.mxu0
        %v2676 = vadd.f32 0.0, %v2675
        %2677 = vmatmul.bf16.gmra.mxu0 %v2640
        %v2678 = vpop.f32.mrf.mxu0
        %v2679 = vadd.f32 0.0, %v2678
        %v2680 = vpop.f32.mrf.mxu0
        %v2681 = vadd.f32 0.0, %v2680
        %2682 = vmatmul.bf16.gmra.mxu0 %v2643
        %v2683 = vpop.f32.mrf.mxu0
        %v2684 = vadd.f32 0.0, %v2683
        %v2685 = vpop.f32.mrf.mxu0
        %v2686 = vadd.f32 0.0, %v2685
        %2687 = vmatmul.bf16.gmra.mxu0 %v2646
        %v2688 = vpop.f32.mrf.mxu0
        %v2689 = vadd.f32 0.0, %v2688
        %v2690 = vpop.f32.mrf.mxu0
        %v2691 = vadd.f32 0.0, %v2690
        %2692 = vmatmul.bf16.gmra.mxu0 %v2649
        %v2693 = vpop.f32.mrf.mxu0
        %v2694 = vadd.f32 0.0, %v2693
        %v2695 = vpop.f32.mrf.mxu0
        %v2696 = vadd.f32 0.0, %v2695
        %2697 = vmatmul.bf16.gmra.mxu0 %v2652
        %v2698 = vpop.f32.mrf.mxu0
        %v2699 = vadd.f32 0.0, %v2698
        %v2700 = vpop.f32.mrf.mxu0
        %v2701 = vadd.f32 0.0, %v2700
        %2702 = vdwg.mxu0
        %v2703 = vld [vmem:[%s504] sm:$0xff]
        %v2704 = vld [vmem:[%s504 + $0x8] sm:$0xff]
        %v2705 = vld [vmem:[%s504 + $0x10] sm:$0xff]
        %v2706 = vld [vmem:[%s504 + $0x18] sm:$0xff]
        %v2707 = vld [vmem:[%s504 + $0x20] sm:$0xff]
        %v2708 = vld [vmem:[%s504 + $0x28] sm:$0xff]
        %v2709 = vld [vmem:[%s504 + $0x30] sm:$0xff]
        %v2710 = vld [vmem:[%s504 + $0x38] sm:$0xff]
        %v2711 = vld [vmem:[%s504 + $0x40] sm:$0xff]
        %v2712 = vld [vmem:[%s504 + $0x48] sm:$0xff]
        %v2713 = vld [vmem:[%s504 + $0x50] sm:$0xff]
        %v2714 = vld [vmem:[%s504 + $0x58] sm:$0xff]
        %v2715 = vld [vmem:[%s504 + $0x60] sm:$0xff]
        %v2716 = vld [vmem:[%s504 + $0x68] sm:$0xff]
        %v2717 = vld [vmem:[%s504 + $0x70] sm:$0xff]
        %v2718 = vld [vmem:[%s504 + $0x78] sm:$0xff]
        %v2719 = vadd.f32 %v2664, %v2703
        %v2720 = vadd.f32 %v2666, %v2704
        %v2721 = vadd.f32 %v2669, %v2705
        %v2722 = vadd.f32 %v2671, %v2706
        %v2723 = vadd.f32 %v2674, %v2707
        %v2724 = vadd.f32 %v2676, %v2708
        %v2725 = vadd.f32 %v2679, %v2709
        %v2726 = vadd.f32 %v2681, %v2710
        %v2727 = vadd.f32 %v2684, %v2711
        %v2728 = vadd.f32 %v2686, %v2712
        %v2729 = vadd.f32 %v2689, %v2713
        %v2730 = vadd.f32 %v2691, %v2714
        %v2731 = vadd.f32 %v2694, %v2715
        %v2732 = vadd.f32 %v2696, %v2716
        %v2733 = vadd.f32 %v2699, %v2717
        %v2734 = vadd.f32 %v2701, %v2718
        %2735 = vst [vmem:[%s565] sm:$0xff] %v2719
        %2736 = vst [vmem:[%s565 + $0x8] sm:$0xff] %v2720
        %2737 = vst [vmem:[%s565 + $0x10] sm:$0xff] %v2721
        %2738 = vst [vmem:[%s565 + $0x18] sm:$0xff] %v2722
        %2739 = vst [vmem:[%s565 + $0x20] sm:$0xff] %v2723
        %2740 = vst [vmem:[%s565 + $0x28] sm:$0xff] %v2724
        %2741 = vst [vmem:[%s565 + $0x30] sm:$0xff] %v2725
        %2742 = vst [vmem:[%s565 + $0x38] sm:$0xff] %v2726
        %2743 = vst [vmem:[%s565 + $0x40] sm:$0xff] %v2727
        %2744 = vst [vmem:[%s565 + $0x48] sm:$0xff] %v2728
        %2745 = vst [vmem:[%s565 + $0x50] sm:$0xff] %v2729
        %2746 = vst [vmem:[%s565 + $0x58] sm:$0xff] %v2730
        %2747 = vst [vmem:[%s565 + $0x60] sm:$0xff] %v2731
        %2748 = vst [vmem:[%s565 + $0x68] sm:$0xff] %v2732
        %2749 = vst [vmem:[%s565 + $0x70] sm:$0xff] %v2733
        %2750 = vst [vmem:[%s565 + $0x78] sm:$0xff] %v2734
        %s2751 = sand.u32 %s343, 1
        %s2752 = scalar_lea.sflag [#allocation6], %s2751
        %s2753 = sand.u32 %s343, 1
        %s2754 = smul.addr %s2753, 128
        %s2755 = scalar_lea.vmem [#allocation10], %s2754
        // Predicated region
        $region81: #{tpu_custom_call.1} parent=67 // pred_check
          %p2756 = pneg %p353
        $region82: #{tpu_custom_call.1} parent=67 // pred_check_branch
          %2758 = sbr.rel (%p2756) target = $region84
        $region83: #{tpu_custom_call.1} parent=67 // pred_region
          %s2759 = smul.u32 8, %s37
          %2761 = vsyncadd %s2752, 0
          %s2762 = smul.addr %s2759, 2
          %s2763 = smul.addr %s36, 32
          %s2764 = sadd.s32 %s2762, %s2763
          %s2765 = smul.addr %s2764, 8
          %s2766 = scalar_lea.hbm %s12, %s2765
          %s2767 = sshll.u32 %s2755, 4
          %s2768 = int_to_ptr.vmem [resolvable:$true] %s2767
          %s2769 = sshll.u32 %s2766, 4
          %s2770 = int_to_ptr.hbm [resolvable:$true] %s2769
          %2775 = dma.vmem_to_hbm [thread:$0]  %s2768, 2048, %s2770, %s2752, 128, 128, 8
        $region84: #{tpu_custom_call.1} parent=67 // pred_fallthru
          _
      $region68: #{tpu_custom_call.1} parent=5 // pred_fallthru
        _
      %p2776 = scmp.le.s32.totalorder 2, %s27
      // Predicated region
      $region85: #{tpu_custom_call.1} parent=5 // pred_check
        %p2777 = pneg %p2776
      $region86: #{tpu_custom_call.1} parent=5 // pred_check_branch
        %2779 = sbr.rel (%p2777) target = $region88
      $region87: #{tpu_custom_call.1} parent=5 // pred_region
        %s2780 = ssub.s32 %s27, 2
        // Predicated region
        $region89: #{tpu_custom_call.1} parent=87 // pred_check
          %p2781 = pneg %p359
        $region90: #{tpu_custom_call.1} parent=87 // pred_check_branch
          %2783 = sbr.rel (%p2781) target = $region92
        $region91: #{tpu_custom_call.1} parent=87 // pred_region
          %s2784 = sand.u32 %s344, 1
          %s2785 = scalar_lea.sflag [#allocation6], %s2784
          %s2786 = sand.u32 %s344, 1
          %s2787 = smul.addr %s2786, 128
          %s2788 = scalar_lea.vmem [#allocation10], %s2787
          %2790 = dma.done %s2785, 2048
        $region92: #{tpu_custom_call.1} parent=87 // pred_fallthru
          _
      $region88: #{tpu_custom_call.1} parent=5 // pred_fallthru
        _
    $region6: #{tpu_custom_call.1} parent=1 // loop_footer
      %s31 = sadd.s32 1, %s27
    $region7: #{tpu_custom_call.1} parent=1 // loop_footer_branch
      %26 = sbr.rel target = $region3
    $region8: #{tpu_custom_call.1} parent=1 // loop_exit
      _
    %2791 = vsyncpa [#allocation5], 1
    %s2792 = scalar_lea.sflag [#allocation5], 1
    %2793 = vsyncpa %s2792, 1
    %2794 = vsyncpa [#allocation8], 1
    %s2795 = scalar_lea.sflag [#allocation8], 1
    %2796 = vsyncpa %s2795, 1
    %2797 = vsyncpa [#allocation6], 1
    %s2798 = scalar_lea.sflag [#allocation6], 1
    %2799 = vsyncpa %s2798, 1

</llo_original>
